<compile_context>
chip_gen: v7x
topology: tpu7x:2x2x1
jax: 0.10.0
libtpu: 0.0.40
codegen_flags: <defaults>
</compile_context>

<pallas_src>
import math
import functools

import jax
import jax.numpy as jnp
from jax import lax
from jax.experimental import pallas as pl
from jax.experimental.pallas import tpu as pltpu


def _layernorm(x, gamma, beta, eps=1e-5):
    mu = jnp.mean(x, axis=-1, keepdims=True)
    xc = x - mu
    var = jnp.mean(xc * xc, axis=-1, keepdims=True)
    return xc * lax.rsqrt(var + eps) * gamma + beta


def encoder_layer_kernel(
    x_ref,
    wqkv_ref, wo_h_ref, w1_ref, w2_ref,
    bqkv_ref, bo_ref, b1_ref, b2_ref,
    g1_ref, be1_ref, g2_ref, be2_ref,
    out_ref,
    *, num_heads: int, compute_dtype,
):
    bb, S, D = x_ref.shape
    H = num_heads
    dk = D // H
    scale = 1.0 / math.sqrt(dk)
    f32 = jnp.float32

    # ---- fold the batch block into the matmul M dimension (leading-dim collapse only)
    x2d = x_ref[...].reshape(bb * S, D)          # (M, D) f32 residual copy
    xc = x2d.astype(compute_dtype)

    # ---- fused Q/K/V projection: one (M, D) @ (D, 3D) MXU matmul, f32 accumulation
    qkv = jnp.dot(xc, wqkv_ref[...], preferred_element_type=f32) + bqkv_ref[...]

    # ---- multi-head attention (per sequence, per head) ------------------------------
    att_rows = []
    for b in range(bb):                          # static; sublane-dim row slices
        r = b * S
        acc = None
        for h in range(H):                       # static; see TODO(synk) above
            c = h * dk
            qh = (qkv[r:r + S, c:c + dk] * scale).astype(compute_dtype)        # (S, dk)
            kh = qkv[r:r + S, D + c:D + c + dk].astype(compute_dtype)          # (S, dk)
            vh = qkv[r:r + S, 2 * D + c:2 * D + c + dk].astype(compute_dtype)  # (S, dk)
            # scores: contract over dk directly -> no K^T materialized
            s = lax.dot_general(qh, kh, (((1,), (1,)), ((), ())),
                                preferred_element_type=f32)                    # (S, S)
            p = jnp.exp(s - jnp.max(s, axis=-1, keepdims=True))
            l = jnp.sum(p, axis=-1, keepdims=True)
            o = lax.dot_general(p.astype(compute_dtype), vh,
                                (((1,), (0,)), ((), ())),
                                preferred_element_type=f32)                    # (S, dk)
            # normalize the (S, dk) output (not the (S, S) tile); EUP reciprocal
            o = o * pl.reciprocal(l, approx=True)
            # head merge by accumulation against W_o's per-head slab (no lane concat)
            contrib = jnp.dot(o.astype(compute_dtype), wo_h_ref[h],
                              preferred_element_type=f32)                      # (S, D)
            acc = contrib if acc is None else acc + contrib
        att_rows.append(acc)
    att2d = att_rows[0] if bb == 1 else jnp.concatenate(att_rows, axis=0)      # (M, D)
    att2d = att2d + bo_ref[...]

    # ---- residual + LayerNorm 1 (dropout == identity in eval) -----------------------
    x1 = _layernorm(x2d + att2d, g1_ref[...], be1_ref[...])

    # ---- point-wise FFN at M = bb*S ---------------------------------------------------
    h1 = jnp.dot(x1.astype(compute_dtype), w1_ref[...], preferred_element_type=f32)
    h1 = jnp.maximum(h1 + b1_ref[...], 0.0)
    ffn = jnp.dot(h1.astype(compute_dtype), w2_ref[...], preferred_element_type=f32)
    ffn = ffn + b2_ref[...]

    # ---- residual + LayerNorm 2 -------------------------------------------------------
    y = _layernorm(x1 + ffn, g2_ref[...], be2_ref[...])
    out_ref[...] = y.reshape(bb, S, D).astype(out_ref.dtype)


def encoder_layer(x, params, num_heads, *, compute_dtype=jnp.bfloat16, batch_block=None):
    """x: (B, S, D) float32; params: dict of weights (see init_params)."""
    B, S, D = x.shape
    dk = D // num_heads
    if batch_block is None:
        batch_block = B                      # toy shapes: whole batch in one grid step
    assert B % batch_block == 0

    # Host-side (one-time) weight repacking:
    #   * Q/K/V weights fused -> single wide projection matmul.
    #   * W_o pre-split per head (H, dk, D) -> in-kernel head merge by accumulation.
    #   * matrices cast to compute_dtype (bf16 default) -> MXU-rate operands and half the
    #     weight VMEM/HBM traffic; biases / LayerNorm params stay f32.
    wqkv = jnp.concatenate([params["wq"], params["wk"], params["wv"]], axis=1)  # (D, 3D)
    bqkv = jnp.concatenate([params["bq"], params["bk"], params["bv"]], axis=1)  # (1, 3D)
    wo_h = params["wo"].reshape(num_heads, dk, D)

    mats = [wqkv.astype(compute_dtype), wo_h.astype(compute_dtype),
            params["w1"].astype(compute_dtype), params["w2"].astype(compute_dtype)]
    vecs = [bqkv, params["bo"], params["b1"], params["b2"],
            params["g1"], params["be1"], params["g2"], params["be2"]]
    vecs = [v.astype(jnp.float32) for v in vecs]

    def invariant_spec(shape):
        nd = len(shape)
        # Grid-invariant block (same (0,...) block every step).
        # TODO(synk): single-buffer these (pl.Buffered(1)) when available so resident
        # weights aren't double-buffered (matters on v7x's 64 MiB VMEM).
        return pl.BlockSpec(shape, lambda b, _nd=nd: (0,) * _nd)

    in_specs = [pl.BlockSpec((batch_block, S, D), lambda b: (b, 0, 0))]
    in_specs += [invariant_spec(a.shape) for a in mats + vecs]

    kernel = functools.partial(encoder_layer_kernel, num_heads=num_heads,
                               compute_dtype=compute_dtype)
    return pl.pallas_call(
        kernel,
        out_shape=jax.ShapeDtypeStruct((B, S, D), x.dtype),
        grid=(B // batch_block,),
        in_specs=in_specs,
        out_specs=pl.BlockSpec((batch_block, S, D), lambda b: (b, 0, 0)),
        compiler_params=pltpu.CompilerParams(dimension_semantics=("parallel",)),
    )(x, *mats, *vecs)


def init_params(key, dim_model, dim_ffn):
    ks = jax.random.split(key, 10)
    scale = 0.05

    def lin(k, fan_in, fan_out):
        kw, kb = jax.random.split(k)
        w = jax.random.normal(kw, (fan_in, fan_out), jnp.float32) * scale
        b = jax.random.normal(kb, (1, fan_out), jnp.float32) * scale
        return w, b

    wq, bq = lin(ks[0], dim_model, dim_model)
    wk, bk = lin(ks[1], dim_model, dim_model)
    wv, bv = lin(ks[2], dim_model, dim_model)
    wo, bo = lin(ks[3], dim_model, dim_model)
    w1, b1 = lin(ks[4], dim_model, dim_ffn)
    w2, b2 = lin(ks[5], dim_ffn, dim_model)
    # LayerNorm affine params (PyTorch default init: gamma=1, beta=0)
    g1 = jnp.ones((1, dim_model), jnp.float32)
    be1 = jnp.zeros((1, dim_model), jnp.float32)
    g2 = jnp.ones((1, dim_model), jnp.float32)
    be2 = jnp.zeros((1, dim_model), jnp.float32)
    return dict(wq=wq, bq=bq, wk=wk, bk=bk, wv=wv, bv=bv, wo=wo, bo=bo,
                w1=w1, b1=b1, w2=w2, b2=b2, g1=g1, be1=be1, g2=g2, be2=be2)


def encoder_layer_ref(x, p, num_heads):
    """Pure-JAX f32 reference mirroring the PyTorch forward (dropout = identity)."""
    B, S, D = x.shape
    dk = D // num_heads

    def split_heads(t):  # (B,S,D) -> (B,H,S,dk)
        return t.reshape(B, S, num_heads, dk).transpose(0, 2, 1, 3)

    q = split_heads(x @ p["wq"] + p["bq"])
    k = split_heads(x @ p["wk"] + p["bk"])
    v = split_heads(x @ p["wv"] + p["bv"])
    scores = jnp.einsum("bhsd,bhtd->bhst", q, k) / math.sqrt(dk)
    att = jax.nn.softmax(scores, axis=-1)
    o = jnp.einsum("bhst,bhtd->bhsd", att, v)
    o = o.transpose(0, 2, 1, 3).reshape(B, S, D) @ p["wo"] + p["bo"]

    def ln(t, g, b, eps=1e-5):
        mu = t.mean(-1, keepdims=True)
        var = ((t - mu) ** 2).mean(-1, keepdims=True)
        return (t - mu) / jnp.sqrt(var + eps) * g + b

    x1 = ln(x + o, p["g1"], p["be1"])
    h = jax.nn.relu(x1 @ p["w1"] + p["b1"])
    ffn = h @ p["w2"] + p["b2"]
    return ln(x1 + ffn, p["g2"], p["be2"])


if __name__ == "__main__":
    # Small shapes consistent with the module: batch=2, seq=8, dim_model=32,
    # num_heads=4, dim_ffn=64.
    B, S, D, H, FF = 2, 8, 32, 4, 64
    key = jax.random.PRNGKey(0)
    kx, kp = jax.random.split(key)
    x = jax.random.normal(kx, (B, S, D), jnp.float32)
    params = init_params(kp, D, FF)

    ref = encoder_layer_ref(x, params, H)

    # Exact-semantics path (f32 MXU operands) — tight match vs the pure-JAX reference.
    out_f32 = jax.block_until_ready(encoder_layer(x, params, H, compute_dtype=jnp.float32))
    assert out_f32.shape == (B, S, D)
    assert jnp.max(jnp.abs(out_f32 - ref)) < 2e-3, "f32 kernel mismatch vs reference"

    # Default fast path: bf16 MXU operands, f32 accumulation / statistics.
    out = jax.block_until_ready(encoder_layer(x, params, H))
    assert out.shape == (B, S, D)
    assert jnp.max(jnp.abs(out - ref)) < 3e-2, "bf16 kernel mismatch vs reference"

    print("KERNEL_OK")
</pallas_src>

<mosaic_0001>
module attributes {stable_mosaic.version = 11 : i64} {
  func.func @encoder_layer_kernel(%arg0: i32, %arg1: memref<2x8x32xf32, #tpu.memory_space<vmem>>, %arg2: memref<32x96xf32, #tpu.memory_space<vmem>>, %arg3: memref<4x8x32xf32, #tpu.memory_space<vmem>>, %arg4: memref<32x64xf32, #tpu.memory_space<vmem>>, %arg5: memref<64x32xf32, #tpu.memory_space<vmem>>, %arg6: memref<1x96xf32, #tpu.memory_space<vmem>>, %arg7: memref<1x32xf32, #tpu.memory_space<vmem>>, %arg8: memref<1x64xf32, #tpu.memory_space<vmem>>, %arg9: memref<1x32xf32, #tpu.memory_space<vmem>>, %arg10: memref<1x32xf32, #tpu.memory_space<vmem>>, %arg11: memref<1x32xf32, #tpu.memory_space<vmem>>, %arg12: memref<1x32xf32, #tpu.memory_space<vmem>>, %arg13: memref<1x32xf32, #tpu.memory_space<vmem>>, %arg14: memref<2x8x32xf32, #tpu.memory_space<vmem>>) attributes {dimension_semantics = [#tpu.dimension_semantics<parallel>], iteration_bounds = array<i64: 1>, scalar_prefetch = 0 : i64, scratch_operands = 0 : i64, tpu.core_type = #tpu.core_type<tc>, window_params = [{transform_indices = @transform_0, window_bounds = array<i64: 2, 8, 32>}, {pipeline_mode = #tpu.pipeline_mode<synchronous>, transform_indices = @transform_1, window_bounds = array<i64: 32, 96>}, {pipeline_mode = #tpu.pipeline_mode<synchronous>, transform_indices = @transform_2, window_bounds = array<i64: 4, 8, 32>}, {pipeline_mode = #tpu.pipeline_mode<synchronous>, transform_indices = @transform_3, window_bounds = array<i64: 32, 64>}, {pipeline_mode = #tpu.pipeline_mode<synchronous>, transform_indices = @transform_4, window_bounds = array<i64: 64, 32>}, {pipeline_mode = #tpu.pipeline_mode<synchronous>, transform_indices = @transform_5, window_bounds = array<i64: 1, 96>}, {pipeline_mode = #tpu.pipeline_mode<synchronous>, transform_indices = @transform_6, window_bounds = array<i64: 1, 32>}, {pipeline_mode = #tpu.pipeline_mode<synchronous>, transform_indices = @transform_7, window_bounds = array<i64: 1, 64>}, {pipeline_mode = #tpu.pipeline_mode<synchronous>, transform_indices = @transform_8, window_bounds = array<i64: 1, 32>}, {pipeline_mode = #tpu.pipeline_mode<synchronous>, transform_indices = @transform_9, window_bounds = array<i64: 1, 32>}, {pipeline_mode = #tpu.pipeline_mode<synchronous>, transform_indices = @transform_10, window_bounds = array<i64: 1, 32>}, {pipeline_mode = #tpu.pipeline_mode<synchronous>, transform_indices = @transform_11, window_bounds = array<i64: 1, 32>}, {pipeline_mode = #tpu.pipeline_mode<synchronous>, transform_indices = @transform_12, window_bounds = array<i64: 1, 32>}, {transform_indices = @transform_13, window_bounds = array<i64: 2, 8, 32>}]} {
    %c0 = arith.constant 0 : index
    %c0_0 = arith.constant 0 : index
    %c0_1 = arith.constant 0 : index
    %0 = vector.load %arg1[%c0, %c0_0, %c0_1] : memref<2x8x32xf32, #tpu.memory_space<vmem>>, vector<2x8x32xf32>
    %1 = vector.shape_cast %0 : vector<2x8x32xf32> to vector<16x32xf32>
    %c0_2 = arith.constant 0 : index
    %c0_3 = arith.constant 0 : index
    %2 = vector.load %arg2[%c0_2, %c0_3] : memref<32x96xf32, #tpu.memory_space<vmem>>, vector<32x96xf32>
    %cst = arith.constant dense<0.000000e+00> : vector<16x96xf32>
    %3 = tpu.matmul %1, %2, %cst {dimension_numbers = #tpu.dot_dimension_numbers<[1], [0], [0], [1], [0, 0, 1, 1], [], []>} : vector<16x32xf32>, vector<32x96xf32>, vector<16x96xf32> -> vector<16x96xf32>
    %c0_4 = arith.constant 0 : index
    %c0_5 = arith.constant 0 : index
    %4 = vector.load %arg6[%c0_4, %c0_5] : memref<1x96xf32, #tpu.memory_space<vmem>>, vector<1x96xf32>
    %5 = vector.broadcast %4 : vector<1x96xf32> to vector<16x96xf32>
    %6 = arith.addf %3, %5 : vector<16x96xf32>
    %7 = vector.extract_strided_slice %6 {offsets = [0, 0], sizes = [8, 8], strides = [1, 1]} : vector<16x96xf32> to vector<8x8xf32>
    %cst_6 = arith.constant 0.353553385 : f32
    %8 = vector.broadcast %cst_6 : f32 to vector<8x8xf32>
    %9 = arith.mulf %7, %8 : vector<8x8xf32>
    %10 = vector.extract_strided_slice %6 {offsets = [0, 32], sizes = [8, 8], strides = [1, 1]} : vector<16x96xf32> to vector<8x8xf32>
    %11 = vector.extract_strided_slice %6 {offsets = [0, 64], sizes = [8, 8], strides = [1, 1]} : vector<16x96xf32> to vector<8x8xf32>
    %cst_7 = arith.constant dense<0.000000e+00> : vector<8x8xf32>
    %12 = tpu.matmul %9, %10, %cst_7 {dimension_numbers = #tpu.dot_dimension_numbers<[1], [1], [0], [0], [0, 0, 1, 0], [], []>} : vector<8x8xf32>, vector<8x8xf32>, vector<8x8xf32> -> vector<8x8xf32>
    %cst_8 = arith.constant dense<0xFF800000> : vector<8xf32>
    %13 = vector.multi_reduction <maximumf>, %12, %cst_8 [1] : vector<8x8xf32> to vector<8xf32>
    %14 = vector.shape_cast %13 : vector<8xf32> to vector<8x1xf32>
    %15 = vector.broadcast %14 : vector<8x1xf32> to vector<8x8xf32>
    %16 = arith.subf %12, %15 : vector<8x8xf32>
    %17 = math.exp %16 : vector<8x8xf32>
    %cst_9 = arith.constant dense<0.000000e+00> : vector<8xf32>
    %18 = vector.multi_reduction <add>, %17, %cst_9 [1] : vector<8x8xf32> to vector<8xf32>
    %19 = vector.shape_cast %18 : vector<8xf32> to vector<8x1xf32>
    %cst_10 = arith.constant dense<0.000000e+00> : vector<8x8xf32>
    %20 = tpu.matmul %17, %11, %cst_10 {dimension_numbers = #tpu.dot_dimension_numbers<[1], [0], [0], [1], [0, 0, 1, 1], [], []>} : vector<8x8xf32>, vector<8x8xf32>, vector<8x8xf32> -> vector<8x8xf32>
    %21 = tpu.reciprocal %19 {approx = true} : vector<8x1xf32> -> vector<8x1xf32>
    %22 = vector.broadcast %21 : vector<8x1xf32> to vector<8x8xf32>
    %23 = arith.mulf %20, %22 : vector<8x8xf32>
    %c0_11 = arith.constant 0 : index
    %c0_12 = arith.constant 0 : index
    %c0_13 = arith.constant 0 : index
    %24 = vector.load %arg3[%c0_11, %c0_12, %c0_13] : memref<4x8x32xf32, #tpu.memory_space<vmem>>, vector<1x8x32xf32>
    %25 = vector.shape_cast %24 : vector<1x8x32xf32> to vector<8x32xf32>
    %cst_14 = arith.constant dense<0.000000e+00> : vector<8x32xf32>
    %26 = tpu.matmul %23, %25, %cst_14 {dimension_numbers = #tpu.dot_dimension_numbers<[1], [0], [0], [1], [0, 0, 1, 1], [], []>} : vector<8x8xf32>, vector<8x32xf32>, vector<8x32xf32> -> vector<8x32xf32>
    %27 = vector.extract_strided_slice %6 {offsets = [0, 8], sizes = [8, 8], strides = [1, 1]} : vector<16x96xf32> to vector<8x8xf32>
    %cst_15 = arith.constant 0.353553385 : f32
    %28 = vector.broadcast %cst_15 : f32 to vector<8x8xf32>
    %29 = arith.mulf %27, %28 : vector<8x8xf32>
    %30 = vector.extract_strided_slice %6 {offsets = [0, 40], sizes = [8, 8], strides = [1, 1]} : vector<16x96xf32> to vector<8x8xf32>
    %31 = vector.extract_strided_slice %6 {offsets = [0, 72], sizes = [8, 8], strides = [1, 1]} : vector<16x96xf32> to vector<8x8xf32>
    %cst_16 = arith.constant dense<0.000000e+00> : vector<8x8xf32>
    %32 = tpu.matmul %29, %30, %cst_16 {dimension_numbers = #tpu.dot_dimension_numbers<[1], [1], [0], [0], [0, 0, 1, 0], [], []>} : vector<8x8xf32>, vector<8x8xf32>, vector<8x8xf32> -> vector<8x8xf32>
    %cst_17 = arith.constant dense<0xFF800000> : vector<8xf32>
    %33 = vector.multi_reduction <maximumf>, %32, %cst_17 [1] : vector<8x8xf32> to vector<8xf32>
    %34 = vector.shape_cast %33 : vector<8xf32> to vector<8x1xf32>
    %35 = vector.broadcast %34 : vector<8x1xf32> to vector<8x8xf32>
    %36 = arith.subf %32, %35 : vector<8x8xf32>
    %37 = math.exp %36 : vector<8x8xf32>
    %cst_18 = arith.constant dense<0.000000e+00> : vector<8xf32>
    %38 = vector.multi_reduction <add>, %37, %cst_18 [1] : vector<8x8xf32> to vector<8xf32>
    %39 = vector.shape_cast %38 : vector<8xf32> to vector<8x1xf32>
    %cst_19 = arith.constant dense<0.000000e+00> : vector<8x8xf32>
    %40 = tpu.matmul %37, %31, %cst_19 {dimension_numbers = #tpu.dot_dimension_numbers<[1], [0], [0], [1], [0, 0, 1, 1], [], []>} : vector<8x8xf32>, vector<8x8xf32>, vector<8x8xf32> -> vector<8x8xf32>
    %41 = tpu.reciprocal %39 {approx = true} : vector<8x1xf32> -> vector<8x1xf32>
    %42 = vector.broadcast %41 : vector<8x1xf32> to vector<8x8xf32>
    %43 = arith.mulf %40, %42 : vector<8x8xf32>
    %c1 = arith.constant 1 : index
    %c0_20 = arith.constant 0 : index
    %c0_21 = arith.constant 0 : index
    %44 = vector.load %arg3[%c1, %c0_20, %c0_21] : memref<4x8x32xf32, #tpu.memory_space<vmem>>, vector<1x8x32xf32>
    %45 = vector.shape_cast %44 : vector<1x8x32xf32> to vector<8x32xf32>
    %cst_22 = arith.constant dense<0.000000e+00> : vector<8x32xf32>
    %46 = tpu.matmul %43, %45, %cst_22 {dimension_numbers = #tpu.dot_dimension_numbers<[1], [0], [0], [1], [0, 0, 1, 1], [], []>} : vector<8x8xf32>, vector<8x32xf32>, vector<8x32xf32> -> vector<8x32xf32>
    %47 = arith.addf %26, %46 : vector<8x32xf32>
    %48 = vector.extract_strided_slice %6 {offsets = [0, 16], sizes = [8, 8], strides = [1, 1]} : vector<16x96xf32> to vector<8x8xf32>
    %cst_23 = arith.constant 0.353553385 : f32
    %49 = vector.broadcast %cst_23 : f32 to vector<8x8xf32>
    %50 = arith.mulf %48, %49 : vector<8x8xf32>
    %51 = vector.extract_strided_slice %6 {offsets = [0, 48], sizes = [8, 8], strides = [1, 1]} : vector<16x96xf32> to vector<8x8xf32>
    %52 = vector.extract_strided_slice %6 {offsets = [0, 80], sizes = [8, 8], strides = [1, 1]} : vector<16x96xf32> to vector<8x8xf32>
    %cst_24 = arith.constant dense<0.000000e+00> : vector<8x8xf32>
    %53 = tpu.matmul %50, %51, %cst_24 {dimension_numbers = #tpu.dot_dimension_numbers<[1], [1], [0], [0], [0, 0, 1, 0], [], []>} : vector<8x8xf32>, vector<8x8xf32>, vector<8x8xf32> -> vector<8x8xf32>
    %cst_25 = arith.constant dense<0xFF800000> : vector<8xf32>
    %54 = vector.multi_reduction <maximumf>, %53, %cst_25 [1] : vector<8x8xf32> to vector<8xf32>
    %55 = vector.shape_cast %54 : vector<8xf32> to vector<8x1xf32>
    %56 = vector.broadcast %55 : vector<8x1xf32> to vector<8x8xf32>
    %57 = arith.subf %53, %56 : vector<8x8xf32>
    %58 = math.exp %57 : vector<8x8xf32>
    %cst_26 = arith.constant dense<0.000000e+00> : vector<8xf32>
    %59 = vector.multi_reduction <add>, %58, %cst_26 [1] : vector<8x8xf32> to vector<8xf32>
    %60 = vector.shape_cast %59 : vector<8xf32> to vector<8x1xf32>
    %cst_27 = arith.constant dense<0.000000e+00> : vector<8x8xf32>
    %61 = tpu.matmul %58, %52, %cst_27 {dimension_numbers = #tpu.dot_dimension_numbers<[1], [0], [0], [1], [0, 0, 1, 1], [], []>} : vector<8x8xf32>, vector<8x8xf32>, vector<8x8xf32> -> vector<8x8xf32>
    %62 = tpu.reciprocal %60 {approx = true} : vector<8x1xf32> -> vector<8x1xf32>
    %63 = vector.broadcast %62 : vector<8x1xf32> to vector<8x8xf32>
    %64 = arith.mulf %61, %63 : vector<8x8xf32>
    %c2 = arith.constant 2 : index
    %c0_28 = arith.constant 0 : index
    %c0_29 = arith.constant 0 : index
    %65 = vector.load %arg3[%c2, %c0_28, %c0_29] : memref<4x8x32xf32, #tpu.memory_space<vmem>>, vector<1x8x32xf32>
    %66 = vector.shape_cast %65 : vector<1x8x32xf32> to vector<8x32xf32>
    %cst_30 = arith.constant dense<0.000000e+00> : vector<8x32xf32>
    %67 = tpu.matmul %64, %66, %cst_30 {dimension_numbers = #tpu.dot_dimension_numbers<[1], [0], [0], [1], [0, 0, 1, 1], [], []>} : vector<8x8xf32>, vector<8x32xf32>, vector<8x32xf32> -> vector<8x32xf32>
    %68 = arith.addf %47, %67 : vector<8x32xf32>
    %69 = vector.extract_strided_slice %6 {offsets = [0, 24], sizes = [8, 8], strides = [1, 1]} : vector<16x96xf32> to vector<8x8xf32>
    %cst_31 = arith.constant 0.353553385 : f32
    %70 = vector.broadcast %cst_31 : f32 to vector<8x8xf32>
    %71 = arith.mulf %69, %70 : vector<8x8xf32>
    %72 = vector.extract_strided_slice %6 {offsets = [0, 56], sizes = [8, 8], strides = [1, 1]} : vector<16x96xf32> to vector<8x8xf32>
    %73 = vector.extract_strided_slice %6 {offsets = [0, 88], sizes = [8, 8], strides = [1, 1]} : vector<16x96xf32> to vector<8x8xf32>
    %cst_32 = arith.constant dense<0.000000e+00> : vector<8x8xf32>
    %74 = tpu.matmul %71, %72, %cst_32 {dimension_numbers = #tpu.dot_dimension_numbers<[1], [1], [0], [0], [0, 0, 1, 0], [], []>} : vector<8x8xf32>, vector<8x8xf32>, vector<8x8xf32> -> vector<8x8xf32>
    %cst_33 = arith.constant dense<0xFF800000> : vector<8xf32>
    %75 = vector.multi_reduction <maximumf>, %74, %cst_33 [1] : vector<8x8xf32> to vector<8xf32>
    %76 = vector.shape_cast %75 : vector<8xf32> to vector<8x1xf32>
    %77 = vector.broadcast %76 : vector<8x1xf32> to vector<8x8xf32>
    %78 = arith.subf %74, %77 : vector<8x8xf32>
    %79 = math.exp %78 : vector<8x8xf32>
    %cst_34 = arith.constant dense<0.000000e+00> : vector<8xf32>
    %80 = vector.multi_reduction <add>, %79, %cst_34 [1] : vector<8x8xf32> to vector<8xf32>
    %81 = vector.shape_cast %80 : vector<8xf32> to vector<8x1xf32>
    %cst_35 = arith.constant dense<0.000000e+00> : vector<8x8xf32>
    %82 = tpu.matmul %79, %73, %cst_35 {dimension_numbers = #tpu.dot_dimension_numbers<[1], [0], [0], [1], [0, 0, 1, 1], [], []>} : vector<8x8xf32>, vector<8x8xf32>, vector<8x8xf32> -> vector<8x8xf32>
    %83 = tpu.reciprocal %81 {approx = true} : vector<8x1xf32> -> vector<8x1xf32>
    %84 = vector.broadcast %83 : vector<8x1xf32> to vector<8x8xf32>
    %85 = arith.mulf %82, %84 : vector<8x8xf32>
    %c3 = arith.constant 3 : index
    %c0_36 = arith.constant 0 : index
    %c0_37 = arith.constant 0 : index
    %86 = vector.load %arg3[%c3, %c0_36, %c0_37] : memref<4x8x32xf32, #tpu.memory_space<vmem>>, vector<1x8x32xf32>
    %87 = vector.shape_cast %86 : vector<1x8x32xf32> to vector<8x32xf32>
    %cst_38 = arith.constant dense<0.000000e+00> : vector<8x32xf32>
    %88 = tpu.matmul %85, %87, %cst_38 {dimension_numbers = #tpu.dot_dimension_numbers<[1], [0], [0], [1], [0, 0, 1, 1], [], []>} : vector<8x8xf32>, vector<8x32xf32>, vector<8x32xf32> -> vector<8x32xf32>
    %89 = arith.addf %68, %88 : vector<8x32xf32>
    %90 = vector.extract_strided_slice %6 {offsets = [8, 0], sizes = [8, 8], strides = [1, 1]} : vector<16x96xf32> to vector<8x8xf32>
    %cst_39 = arith.constant 0.353553385 : f32
    %91 = vector.broadcast %cst_39 : f32 to vector<8x8xf32>
    %92 = arith.mulf %90, %91 : vector<8x8xf32>
    %93 = vector.extract_strided_slice %6 {offsets = [8, 32], sizes = [8, 8], strides = [1, 1]} : vector<16x96xf32> to vector<8x8xf32>
    %94 = vector.extract_strided_slice %6 {offsets = [8, 64], sizes = [8, 8], strides = [1, 1]} : vector<16x96xf32> to vector<8x8xf32>
    %cst_40 = arith.constant dense<0.000000e+00> : vector<8x8xf32>
    %95 = tpu.matmul %92, %93, %cst_40 {dimension_numbers = #tpu.dot_dimension_numbers<[1], [1], [0], [0], [0, 0, 1, 0], [], []>} : vector<8x8xf32>, vector<8x8xf32>, vector<8x8xf32> -> vector<8x8xf32>
    %cst_41 = arith.constant dense<0xFF800000> : vector<8xf32>
    %96 = vector.multi_reduction <maximumf>, %95, %cst_41 [1] : vector<8x8xf32> to vector<8xf32>
    %97 = vector.shape_cast %96 : vector<8xf32> to vector<8x1xf32>
    %98 = vector.broadcast %97 : vector<8x1xf32> to vector<8x8xf32>
    %99 = arith.subf %95, %98 : vector<8x8xf32>
    %100 = math.exp %99 : vector<8x8xf32>
    %cst_42 = arith.constant dense<0.000000e+00> : vector<8xf32>
    %101 = vector.multi_reduction <add>, %100, %cst_42 [1] : vector<8x8xf32> to vector<8xf32>
    %102 = vector.shape_cast %101 : vector<8xf32> to vector<8x1xf32>
    %cst_43 = arith.constant dense<0.000000e+00> : vector<8x8xf32>
    %103 = tpu.matmul %100, %94, %cst_43 {dimension_numbers = #tpu.dot_dimension_numbers<[1], [0], [0], [1], [0, 0, 1, 1], [], []>} : vector<8x8xf32>, vector<8x8xf32>, vector<8x8xf32> -> vector<8x8xf32>
    %104 = tpu.reciprocal %102 {approx = true} : vector<8x1xf32> -> vector<8x1xf32>
    %105 = vector.broadcast %104 : vector<8x1xf32> to vector<8x8xf32>
    %106 = arith.mulf %103, %105 : vector<8x8xf32>
    %c0_44 = arith.constant 0 : index
    %c0_45 = arith.constant 0 : index
    %c0_46 = arith.constant 0 : index
    %107 = vector.load %arg3[%c0_44, %c0_45, %c0_46] : memref<4x8x32xf32, #tpu.memory_space<vmem>>, vector<1x8x32xf32>
    %108 = vector.shape_cast %107 : vector<1x8x32xf32> to vector<8x32xf32>
    %cst_47 = arith.constant dense<0.000000e+00> : vector<8x32xf32>
    %109 = tpu.matmul %106, %108, %cst_47 {dimension_numbers = #tpu.dot_dimension_numbers<[1], [0], [0], [1], [0, 0, 1, 1], [], []>} : vector<8x8xf32>, vector<8x32xf32>, vector<8x32xf32> -> vector<8x32xf32>
    %110 = vector.extract_strided_slice %6 {offsets = [8, 8], sizes = [8, 8], strides = [1, 1]} : vector<16x96xf32> to vector<8x8xf32>
    %cst_48 = arith.constant 0.353553385 : f32
    %111 = vector.broadcast %cst_48 : f32 to vector<8x8xf32>
    %112 = arith.mulf %110, %111 : vector<8x8xf32>
    %113 = vector.extract_strided_slice %6 {offsets = [8, 40], sizes = [8, 8], strides = [1, 1]} : vector<16x96xf32> to vector<8x8xf32>
    %114 = vector.extract_strided_slice %6 {offsets = [8, 72], sizes = [8, 8], strides = [1, 1]} : vector<16x96xf32> to vector<8x8xf32>
    %cst_49 = arith.constant dense<0.000000e+00> : vector<8x8xf32>
    %115 = tpu.matmul %112, %113, %cst_49 {dimension_numbers = #tpu.dot_dimension_numbers<[1], [1], [0], [0], [0, 0, 1, 0], [], []>} : vector<8x8xf32>, vector<8x8xf32>, vector<8x8xf32> -> vector<8x8xf32>
    %cst_50 = arith.constant dense<0xFF800000> : vector<8xf32>
    %116 = vector.multi_reduction <maximumf>, %115, %cst_50 [1] : vector<8x8xf32> to vector<8xf32>
    %117 = vector.shape_cast %116 : vector<8xf32> to vector<8x1xf32>
    %118 = vector.broadcast %117 : vector<8x1xf32> to vector<8x8xf32>
    %119 = arith.subf %115, %118 : vector<8x8xf32>
    %120 = math.exp %119 : vector<8x8xf32>
    %cst_51 = arith.constant dense<0.000000e+00> : vector<8xf32>
    %121 = vector.multi_reduction <add>, %120, %cst_51 [1] : vector<8x8xf32> to vector<8xf32>
    %122 = vector.shape_cast %121 : vector<8xf32> to vector<8x1xf32>
    %cst_52 = arith.constant dense<0.000000e+00> : vector<8x8xf32>
    %123 = tpu.matmul %120, %114, %cst_52 {dimension_numbers = #tpu.dot_dimension_numbers<[1], [0], [0], [1], [0, 0, 1, 1], [], []>} : vector<8x8xf32>, vector<8x8xf32>, vector<8x8xf32> -> vector<8x8xf32>
    %124 = tpu.reciprocal %122 {approx = true} : vector<8x1xf32> -> vector<8x1xf32>
    %125 = vector.broadcast %124 : vector<8x1xf32> to vector<8x8xf32>
    %126 = arith.mulf %123, %125 : vector<8x8xf32>
    %c1_53 = arith.constant 1 : index
    %c0_54 = arith.constant 0 : index
    %c0_55 = arith.constant 0 : index
    %127 = vector.load %arg3[%c1_53, %c0_54, %c0_55] : memref<4x8x32xf32, #tpu.memory_space<vmem>>, vector<1x8x32xf32>
    %128 = vector.shape_cast %127 : vector<1x8x32xf32> to vector<8x32xf32>
    %cst_56 = arith.constant dense<0.000000e+00> : vector<8x32xf32>
    %129 = tpu.matmul %126, %128, %cst_56 {dimension_numbers = #tpu.dot_dimension_numbers<[1], [0], [0], [1], [0, 0, 1, 1], [], []>} : vector<8x8xf32>, vector<8x32xf32>, vector<8x32xf32> -> vector<8x32xf32>
    %130 = arith.addf %109, %129 : vector<8x32xf32>
    %131 = vector.extract_strided_slice %6 {offsets = [8, 16], sizes = [8, 8], strides = [1, 1]} : vector<16x96xf32> to vector<8x8xf32>
    %cst_57 = arith.constant 0.353553385 : f32
    %132 = vector.broadcast %cst_57 : f32 to vector<8x8xf32>
    %133 = arith.mulf %131, %132 : vector<8x8xf32>
    %134 = vector.extract_strided_slice %6 {offsets = [8, 48], sizes = [8, 8], strides = [1, 1]} : vector<16x96xf32> to vector<8x8xf32>
    %135 = vector.extract_strided_slice %6 {offsets = [8, 80], sizes = [8, 8], strides = [1, 1]} : vector<16x96xf32> to vector<8x8xf32>
    %cst_58 = arith.constant dense<0.000000e+00> : vector<8x8xf32>
    %136 = tpu.matmul %133, %134, %cst_58 {dimension_numbers = #tpu.dot_dimension_numbers<[1], [1], [0], [0], [0, 0, 1, 0], [], []>} : vector<8x8xf32>, vector<8x8xf32>, vector<8x8xf32> -> vector<8x8xf32>
    %cst_59 = arith.constant dense<0xFF800000> : vector<8xf32>
    %137 = vector.multi_reduction <maximumf>, %136, %cst_59 [1] : vector<8x8xf32> to vector<8xf32>
    %138 = vector.shape_cast %137 : vector<8xf32> to vector<8x1xf32>
    %139 = vector.broadcast %138 : vector<8x1xf32> to vector<8x8xf32>
    %140 = arith.subf %136, %139 : vector<8x8xf32>
    %141 = math.exp %140 : vector<8x8xf32>
    %cst_60 = arith.constant dense<0.000000e+00> : vector<8xf32>
    %142 = vector.multi_reduction <add>, %141, %cst_60 [1] : vector<8x8xf32> to vector<8xf32>
    %143 = vector.shape_cast %142 : vector<8xf32> to vector<8x1xf32>
    %cst_61 = arith.constant dense<0.000000e+00> : vector<8x8xf32>
    %144 = tpu.matmul %141, %135, %cst_61 {dimension_numbers = #tpu.dot_dimension_numbers<[1], [0], [0], [1], [0, 0, 1, 1], [], []>} : vector<8x8xf32>, vector<8x8xf32>, vector<8x8xf32> -> vector<8x8xf32>
    %145 = tpu.reciprocal %143 {approx = true} : vector<8x1xf32> -> vector<8x1xf32>
    %146 = vector.broadcast %145 : vector<8x1xf32> to vector<8x8xf32>
    %147 = arith.mulf %144, %146 : vector<8x8xf32>
    %c2_62 = arith.constant 2 : index
    %c0_63 = arith.constant 0 : index
    %c0_64 = arith.constant 0 : index
    %148 = vector.load %arg3[%c2_62, %c0_63, %c0_64] : memref<4x8x32xf32, #tpu.memory_space<vmem>>, vector<1x8x32xf32>
    %149 = vector.shape_cast %148 : vector<1x8x32xf32> to vector<8x32xf32>
    %cst_65 = arith.constant dense<0.000000e+00> : vector<8x32xf32>
    %150 = tpu.matmul %147, %149, %cst_65 {dimension_numbers = #tpu.dot_dimension_numbers<[1], [0], [0], [1], [0, 0, 1, 1], [], []>} : vector<8x8xf32>, vector<8x32xf32>, vector<8x32xf32> -> vector<8x32xf32>
    %151 = arith.addf %130, %150 : vector<8x32xf32>
    %152 = vector.extract_strided_slice %6 {offsets = [8, 24], sizes = [8, 8], strides = [1, 1]} : vector<16x96xf32> to vector<8x8xf32>
    %cst_66 = arith.constant 0.353553385 : f32
    %153 = vector.broadcast %cst_66 : f32 to vector<8x8xf32>
    %154 = arith.mulf %152, %153 : vector<8x8xf32>
    %155 = vector.extract_strided_slice %6 {offsets = [8, 56], sizes = [8, 8], strides = [1, 1]} : vector<16x96xf32> to vector<8x8xf32>
    %156 = vector.extract_strided_slice %6 {offsets = [8, 88], sizes = [8, 8], strides = [1, 1]} : vector<16x96xf32> to vector<8x8xf32>
    %cst_67 = arith.constant dense<0.000000e+00> : vector<8x8xf32>
    %157 = tpu.matmul %154, %155, %cst_67 {dimension_numbers = #tpu.dot_dimension_numbers<[1], [1], [0], [0], [0, 0, 1, 0], [], []>} : vector<8x8xf32>, vector<8x8xf32>, vector<8x8xf32> -> vector<8x8xf32>
    %cst_68 = arith.constant dense<0xFF800000> : vector<8xf32>
    %158 = vector.multi_reduction <maximumf>, %157, %cst_68 [1] : vector<8x8xf32> to vector<8xf32>
    %159 = vector.shape_cast %158 : vector<8xf32> to vector<8x1xf32>
    %160 = vector.broadcast %159 : vector<8x1xf32> to vector<8x8xf32>
    %161 = arith.subf %157, %160 : vector<8x8xf32>
    %162 = math.exp %161 : vector<8x8xf32>
    %cst_69 = arith.constant dense<0.000000e+00> : vector<8xf32>
    %163 = vector.multi_reduction <add>, %162, %cst_69 [1] : vector<8x8xf32> to vector<8xf32>
    %164 = vector.shape_cast %163 : vector<8xf32> to vector<8x1xf32>
    %cst_70 = arith.constant dense<0.000000e+00> : vector<8x8xf32>
    %165 = tpu.matmul %162, %156, %cst_70 {dimension_numbers = #tpu.dot_dimension_numbers<[1], [0], [0], [1], [0, 0, 1, 1], [], []>} : vector<8x8xf32>, vector<8x8xf32>, vector<8x8xf32> -> vector<8x8xf32>
    %166 = tpu.reciprocal %164 {approx = true} : vector<8x1xf32> -> vector<8x1xf32>
    %167 = vector.broadcast %166 : vector<8x1xf32> to vector<8x8xf32>
    %168 = arith.mulf %165, %167 : vector<8x8xf32>
    %c3_71 = arith.constant 3 : index
    %c0_72 = arith.constant 0 : index
    %c0_73 = arith.constant 0 : index
    %169 = vector.load %arg3[%c3_71, %c0_72, %c0_73] : memref<4x8x32xf32, #tpu.memory_space<vmem>>, vector<1x8x32xf32>
    %170 = vector.shape_cast %169 : vector<1x8x32xf32> to vector<8x32xf32>
    %cst_74 = arith.constant dense<0.000000e+00> : vector<8x32xf32>
    %171 = tpu.matmul %168, %170, %cst_74 {dimension_numbers = #tpu.dot_dimension_numbers<[1], [0], [0], [1], [0, 0, 1, 1], [], []>} : vector<8x8xf32>, vector<8x32xf32>, vector<8x32xf32> -> vector<8x32xf32>
    %172 = arith.addf %151, %171 : vector<8x32xf32>
    %173 = tpu.concatenate %89, %172 in 0 : vector<8x32xf32>, vector<8x32xf32> -> vector<16x32xf32>
    %c0_75 = arith.constant 0 : index
    %c0_76 = arith.constant 0 : index
    %174 = vector.load %arg7[%c0_75, %c0_76] : memref<1x32xf32, #tpu.memory_space<vmem>>, vector<1x32xf32>
    %175 = vector.broadcast %174 : vector<1x32xf32> to vector<16x32xf32>
    %176 = arith.addf %173, %175 : vector<16x32xf32>
    %177 = arith.addf %1, %176 : vector<16x32xf32>
    %c0_77 = arith.constant 0 : index
    %c0_78 = arith.constant 0 : index
    %178 = vector.load %arg10[%c0_77, %c0_78] : memref<1x32xf32, #tpu.memory_space<vmem>>, vector<1x32xf32>
    %c0_79 = arith.constant 0 : index
    %c0_80 = arith.constant 0 : index
    %179 = vector.load %arg11[%c0_79, %c0_80] : memref<1x32xf32, #tpu.memory_space<vmem>>, vector<1x32xf32>
    %cst_81 = arith.constant dense<0.000000e+00> : vector<16xf32>
    %180 = vector.multi_reduction <add>, %177, %cst_81 [1] : vector<16x32xf32> to vector<16xf32>
    %181 = vector.shape_cast %180 : vector<16xf32> to vector<16x1xf32>
    %cst_82 = arith.constant 3.200000e+01 : f32
    %182 = vector.broadcast %cst_82 : f32 to vector<16x1xf32>
    %183 = arith.divf %181, %182 : vector<16x1xf32>
    %184 = vector.broadcast %183 : vector<16x1xf32> to vector<16x32xf32>
    %185 = arith.subf %177, %184 : vector<16x32xf32>
    %186 = arith.mulf %185, %185 : vector<16x32xf32>
    %cst_83 = arith.constant dense<0.000000e+00> : vector<16xf32>
    %187 = vector.multi_reduction <add>, %186, %cst_83 [1] : vector<16x32xf32> to vector<16xf32>
    %188 = vector.shape_cast %187 : vector<16xf32> to vector<16x1xf32>
    %cst_84 = arith.constant 3.200000e+01 : f32
    %189 = vector.broadcast %cst_84 : f32 to vector<16x1xf32>
    %190 = arith.divf %188, %189 : vector<16x1xf32>
    %cst_85 = arith.constant 9.99999974E-6 : f32
    %191 = vector.broadcast %cst_85 : f32 to vector<16x1xf32>
    %192 = arith.addf %190, %191 : vector<16x1xf32>
    %193 = math.rsqrt %192 : vector<16x1xf32>
    %194 = vector.broadcast %193 : vector<16x1xf32> to vector<16x32xf32>
    %195 = arith.mulf %185, %194 : vector<16x32xf32>
    %196 = vector.broadcast %178 : vector<1x32xf32> to vector<16x32xf32>
    %197 = arith.mulf %195, %196 : vector<16x32xf32>
    %198 = vector.broadcast %179 : vector<1x32xf32> to vector<16x32xf32>
    %199 = arith.addf %197, %198 : vector<16x32xf32>
    %c0_86 = arith.constant 0 : index
    %c0_87 = arith.constant 0 : index
    %200 = vector.load %arg4[%c0_86, %c0_87] : memref<32x64xf32, #tpu.memory_space<vmem>>, vector<32x64xf32>
    %cst_88 = arith.constant dense<0.000000e+00> : vector<16x64xf32>
    %201 = tpu.matmul %199, %200, %cst_88 {dimension_numbers = #tpu.dot_dimension_numbers<[1], [0], [0], [1], [0, 0, 1, 1], [], []>} : vector<16x32xf32>, vector<32x64xf32>, vector<16x64xf32> -> vector<16x64xf32>
    %c0_89 = arith.constant 0 : index
    %c0_90 = arith.constant 0 : index
    %202 = vector.load %arg8[%c0_89, %c0_90] : memref<1x64xf32, #tpu.memory_space<vmem>>, vector<1x64xf32>
    %203 = vector.broadcast %202 : vector<1x64xf32> to vector<16x64xf32>
    %204 = arith.addf %201, %203 : vector<16x64xf32>
    %cst_91 = arith.constant 0.000000e+00 : f32
    %205 = vector.broadcast %cst_91 : f32 to vector<16x64xf32>
    %206 = arith.maximumf %204, %205 : vector<16x64xf32>
    %c0_92 = arith.constant 0 : index
    %c0_93 = arith.constant 0 : index
    %207 = vector.load %arg5[%c0_92, %c0_93] : memref<64x32xf32, #tpu.memory_space<vmem>>, vector<64x32xf32>
    %cst_94 = arith.constant dense<0.000000e+00> : vector<16x32xf32>
    %208 = tpu.matmul %206, %207, %cst_94 {dimension_numbers = #tpu.dot_dimension_numbers<[1], [0], [0], [1], [0, 0, 1, 1], [], []>} : vector<16x64xf32>, vector<64x32xf32>, vector<16x32xf32> -> vector<16x32xf32>
    %c0_95 = arith.constant 0 : index
    %c0_96 = arith.constant 0 : index
    %209 = vector.load %arg9[%c0_95, %c0_96] : memref<1x32xf32, #tpu.memory_space<vmem>>, vector<1x32xf32>
    %210 = vector.broadcast %209 : vector<1x32xf32> to vector<16x32xf32>
    %211 = arith.addf %208, %210 : vector<16x32xf32>
    %212 = arith.addf %199, %211 : vector<16x32xf32>
    %c0_97 = arith.constant 0 : index
    %c0_98 = arith.constant 0 : index
    %213 = vector.load %arg12[%c0_97, %c0_98] : memref<1x32xf32, #tpu.memory_space<vmem>>, vector<1x32xf32>
    %c0_99 = arith.constant 0 : index
    %c0_100 = arith.constant 0 : index
    %214 = vector.load %arg13[%c0_99, %c0_100] : memref<1x32xf32, #tpu.memory_space<vmem>>, vector<1x32xf32>
    %cst_101 = arith.constant dense<0.000000e+00> : vector<16xf32>
    %215 = vector.multi_reduction <add>, %212, %cst_101 [1] : vector<16x32xf32> to vector<16xf32>
    %216 = vector.shape_cast %215 : vector<16xf32> to vector<16x1xf32>
    %cst_102 = arith.constant 3.200000e+01 : f32
    %217 = vector.broadcast %cst_102 : f32 to vector<16x1xf32>
    %218 = arith.divf %216, %217 : vector<16x1xf32>
    %219 = vector.broadcast %218 : vector<16x1xf32> to vector<16x32xf32>
    %220 = arith.subf %212, %219 : vector<16x32xf32>
    %221 = arith.mulf %220, %220 : vector<16x32xf32>
    %cst_103 = arith.constant dense<0.000000e+00> : vector<16xf32>
    %222 = vector.multi_reduction <add>, %221, %cst_103 [1] : vector<16x32xf32> to vector<16xf32>
    %223 = vector.shape_cast %222 : vector<16xf32> to vector<16x1xf32>
    %cst_104 = arith.constant 3.200000e+01 : f32
    %224 = vector.broadcast %cst_104 : f32 to vector<16x1xf32>
    %225 = arith.divf %223, %224 : vector<16x1xf32>
    %cst_105 = arith.constant 9.99999974E-6 : f32
    %226 = vector.broadcast %cst_105 : f32 to vector<16x1xf32>
    %227 = arith.addf %225, %226 : vector<16x1xf32>
    %228 = math.rsqrt %227 : vector<16x1xf32>
    %229 = vector.broadcast %228 : vector<16x1xf32> to vector<16x32xf32>
    %230 = arith.mulf %220, %229 : vector<16x32xf32>
    %231 = vector.broadcast %213 : vector<1x32xf32> to vector<16x32xf32>
    %232 = arith.mulf %230, %231 : vector<16x32xf32>
    %233 = vector.broadcast %214 : vector<1x32xf32> to vector<16x32xf32>
    %234 = arith.addf %232, %233 : vector<16x32xf32>
    %235 = vector.shape_cast %234 : vector<16x32xf32> to vector<2x8x32xf32>
    %c0_106 = arith.constant 0 : index
    %c0_107 = arith.constant 0 : index
    %c0_108 = arith.constant 0 : index
    %236 = vector.load %arg14[%c0_106, %c0_107, %c0_108] : memref<2x8x32xf32, #tpu.memory_space<vmem>>, vector<2x8x32xf32>
    tpu.vector_store %arg14[%c0_106, %c0_107, %c0_108], %235 {strides = array<i32>} : memref<2x8x32xf32, #tpu.memory_space<vmem>>, vector<2x8x32xf32>,
    return
  }
  func.func @transform_0(%arg0: i32) -> (i32, i32, i32) {
    %c0_i32 = arith.constant 0 : i32
    %c0_i32_0 = arith.constant 0 : i32
    %c0_i32_1 = arith.constant 0 : i32
    return %arg0, %c0_i32, %c0_i32_0 : i32, i32, i32
  }
  func.func @transform_1(%arg0: i32) -> (i32, i32) {
    %c0_i32 = arith.constant 0 : i32
    %c0_i32_0 = arith.constant 0 : i32
    %c0_i32_1 = arith.constant 0 : i32
    return %c0_i32, %c0_i32_0 : i32, i32
  }
  func.func @transform_2(%arg0: i32) -> (i32, i32, i32) {
    %c0_i32 = arith.constant 0 : i32
    %c0_i32_0 = arith.constant 0 : i32
    %c0_i32_1 = arith.constant 0 : i32
    %c0_i32_2 = arith.constant 0 : i32
    return %c0_i32, %c0_i32_0, %c0_i32_1 : i32, i32, i32
  }
  func.func @transform_3(%arg0: i32) -> (i32, i32) {
    %c0_i32 = arith.constant 0 : i32
    %c0_i32_0 = arith.constant 0 : i32
    %c0_i32_1 = arith.constant 0 : i32
    return %c0_i32, %c0_i32_0 : i32, i32
  }
  func.func @transform_4(%arg0: i32) -> (i32, i32) {
    %c0_i32 = arith.constant 0 : i32
    %c0_i32_0 = arith.constant 0 : i32
    %c0_i32_1 = arith.constant 0 : i32
    return %c0_i32, %c0_i32_0 : i32, i32
  }
  func.func @transform_5(%arg0: i32) -> (i32, i32) {
    %c0_i32 = arith.constant 0 : i32
    %c0_i32_0 = arith.constant 0 : i32
    %c0_i32_1 = arith.constant 0 : i32
    return %c0_i32, %c0_i32_0 : i32, i32
  }
  func.func @transform_6(%arg0: i32) -> (i32, i32) {
    %c0_i32 = arith.constant 0 : i32
    %c0_i32_0 = arith.constant 0 : i32
    %c0_i32_1 = arith.constant 0 : i32
    return %c0_i32, %c0_i32_0 : i32, i32
  }
  func.func @transform_7(%arg0: i32) -> (i32, i32) {
    %c0_i32 = arith.constant 0 : i32
    %c0_i32_0 = arith.constant 0 : i32
    %c0_i32_1 = arith.constant 0 : i32
    return %c0_i32, %c0_i32_0 : i32, i32
  }
  func.func @transform_8(%arg0: i32) -> (i32, i32) {
    %c0_i32 = arith.constant 0 : i32
    %c0_i32_0 = arith.constant 0 : i32
    %c0_i32_1 = arith.constant 0 : i32
    return %c0_i32, %c0_i32_0 : i32, i32
  }
  func.func @transform_9(%arg0: i32) -> (i32, i32) {
    %c0_i32 = arith.constant 0 : i32
    %c0_i32_0 = arith.constant 0 : i32
    %c0_i32_1 = arith.constant 0 : i32
    return %c0_i32, %c0_i32_0 : i32, i32
  }
  func.func @transform_10(%arg0: i32) -> (i32, i32) {
    %c0_i32 = arith.constant 0 : i32
    %c0_i32_0 = arith.constant 0 : i32
    %c0_i32_1 = arith.constant 0 : i32
    return %c0_i32, %c0_i32_0 : i32, i32
  }
  func.func @transform_11(%arg0: i32) -> (i32, i32) {
    %c0_i32 = arith.constant 0 : i32
    %c0_i32_0 = arith.constant 0 : i32
    %c0_i32_1 = arith.constant 0 : i32
    return %c0_i32, %c0_i32_0 : i32, i32
  }
  func.func @transform_12(%arg0: i32) -> (i32, i32) {
    %c0_i32 = arith.constant 0 : i32
    %c0_i32_0 = arith.constant 0 : i32
    %c0_i32_1 = arith.constant 0 : i32
    return %c0_i32, %c0_i32_0 : i32, i32
  }
  func.func @transform_13(%arg0: i32) -> (i32, i32, i32) {
    %c0_i32 = arith.constant 0 : i32
    %c0_i32_0 = arith.constant 0 : i32
    %c0_i32_1 = arith.constant 0 : i32
    return %arg0, %c0_i32, %c0_i32_0 : i32, i32, i32
  }
}

</mosaic_0001>

<llo_original>
// kernel: tpu_custom_call.1
$region0: #{tpu_custom_call.1}
  #allocation0 [shape = 'u32[]', space=smem, size = 0x4, offset = 0x4, fixed_abs, tag = 'smem constant byte address 0x4 - core index']
  #allocation1 [shape = 'u32[144,128]{1,0:T(1,128)}', space=vmem, size = 0x12000, scoped, tag = 'internal scratch']
  %s0 = inlined_call_operand.hbm [shape: f32[2,8,32], index: 0, kind: input, shape index: {}]
  %s1 = inlined_call_operand.vmem [shape: f32[32,96], index: 1, kind: input, shape index: {}]
  %s2 = inlined_call_operand.vmem [shape: f32[4,8,32], index: 2, kind: input, shape index: {}]
  %s3 = inlined_call_operand.vmem [shape: f32[32,64], index: 3, kind: input, shape index: {}]
  %s4 = inlined_call_operand.vmem [shape: f32[64,32], index: 4, kind: input, shape index: {}]
  %s5 = inlined_call_operand.vmem [shape: f32[1,96], index: 5, kind: input, shape index: {}]
  %s6 = inlined_call_operand.vmem [shape: f32[1,32], index: 6, kind: input, shape index: {}]
  %s7 = inlined_call_operand.vmem [shape: f32[1,64], index: 7, kind: input, shape index: {}]
  %s8 = inlined_call_operand.vmem [shape: f32[1,32], index: 8, kind: input, shape index: {}]
  %s9 = inlined_call_operand.vmem [shape: f32[1,32], index: 9, kind: input, shape index: {}]
  %s10 = inlined_call_operand.vmem [shape: f32[1,32], index: 10, kind: input, shape index: {}]
  %s11 = inlined_call_operand.vmem [shape: f32[1,32], index: 11, kind: input, shape index: {}]
  %s12 = inlined_call_operand.vmem [shape: f32[1,32], index: 12, kind: input, shape index: {}]
  %s13 = inlined_call_operand.hbm [shape: f32[2,8,32], index: 13, kind: output, shape index: {}]
  %s14 = sld [smem:[#allocation0]]
  $region66: #{tpu_custom_call.1} parent=0
    _
  %s16 = ssub.s32 1, %s14
  %s17 = scalar_select 0, %s16, %s14
  $region1: #{tpu_custom_call.1} parent=0
    #allocation2 [shape = 'u8[8192]{0}', space=vmem, size = 0x2000, scoped, tag = 'input window, operand 0, single buffered']
    #allocation3 [shape = 's32[1]{0}', space=sflag, size = 0x4, scoped, tag = 'scoped memory for tpu_custom_call.1']
    #allocation4 [shape = 's32[1]{0}', space=sflag, size = 0x4, scoped, tag = 'scoped memory for tpu_custom_call.1']
    #allocation5 [shape = 'u8[8192]{0}', space=vmem, size = 0x2000, scoped, tag = 'output window, operand 0, single buffered']
    %18 = vsyncpa [#allocation3], 0
    %19 = vsyncpa [#allocation4], 0
    // Predicated region
    $region2: #{tpu_custom_call.1} parent=1 // pred_check
      _
    $region3: #{tpu_custom_call.1} parent=1 // pred_check_branch
      %21 = sbr.rel (0) target = $region5
    $region4: #{tpu_custom_call.1} parent=1 // pred_region
      %s23 = ssub.s32 256, 256
      %24 = vsyncadd [#allocation3], %s23
      %s25 = sshll.u32 [#allocation2], 4
      %s26 = int_to_ptr.vmem [resolvable:$true] %s25
      %31 = dma.hbm_to_vmem [thread:$0]  %s0, 256, %s26, [#allocation3], 128, 128, 8
    $region5: #{tpu_custom_call.1} parent=1 // pred_fallthru
      _
    // Predicated region
    $region6: #{tpu_custom_call.1} parent=1 // pred_check
      _
    $region7: #{tpu_custom_call.1} parent=1 // pred_check_branch
      %33 = sbr.rel (0) target = $region9
    $region8: #{tpu_custom_call.1} parent=1 // pred_region
      _
    $region9: #{tpu_custom_call.1} parent=1 // pred_fallthru
      _
    // Predicated region
    $region10: #{tpu_custom_call.1} parent=1 // pred_check
      _
    $region11: #{tpu_custom_call.1} parent=1 // pred_check_branch
      %35 = sbr.rel (0) target = $region13
    $region12: #{tpu_custom_call.1} parent=1 // pred_region
      _
    $region13: #{tpu_custom_call.1} parent=1 // pred_fallthru
      _
    // Predicated region
    $region14: #{tpu_custom_call.1} parent=1 // pred_check
      _
    $region15: #{tpu_custom_call.1} parent=1 // pred_check_branch
      %37 = sbr.rel (0) target = $region17
    $region16: #{tpu_custom_call.1} parent=1 // pred_region
      _
    $region17: #{tpu_custom_call.1} parent=1 // pred_fallthru
      _
    // Predicated region
    $region18: #{tpu_custom_call.1} parent=1 // pred_check
      _
    $region19: #{tpu_custom_call.1} parent=1 // pred_check_branch
      %39 = sbr.rel (0) target = $region21
    $region20: #{tpu_custom_call.1} parent=1 // pred_region
      _
    $region21: #{tpu_custom_call.1} parent=1 // pred_fallthru
      _
    // Predicated region
    $region22: #{tpu_custom_call.1} parent=1 // pred_check
      _
    $region23: #{tpu_custom_call.1} parent=1 // pred_check_branch
      %41 = sbr.rel (0) target = $region25
    $region24: #{tpu_custom_call.1} parent=1 // pred_region
      _
    $region25: #{tpu_custom_call.1} parent=1 // pred_fallthru
      _
    // Predicated region
    $region26: #{tpu_custom_call.1} parent=1 // pred_check
      _
    $region27: #{tpu_custom_call.1} parent=1 // pred_check_branch
      %43 = sbr.rel (0) target = $region29
    $region28: #{tpu_custom_call.1} parent=1 // pred_region
      _
    $region29: #{tpu_custom_call.1} parent=1 // pred_fallthru
      _
    // Predicated region
    $region30: #{tpu_custom_call.1} parent=1 // pred_check
      _
    $region31: #{tpu_custom_call.1} parent=1 // pred_check_branch
      %45 = sbr.rel (0) target = $region33
    $region32: #{tpu_custom_call.1} parent=1 // pred_region
      _
    $region33: #{tpu_custom_call.1} parent=1 // pred_fallthru
      _
    // Predicated region
    $region34: #{tpu_custom_call.1} parent=1 // pred_check
      _
    $region35: #{tpu_custom_call.1} parent=1 // pred_check_branch
      %47 = sbr.rel (0) target = $region37
    $region36: #{tpu_custom_call.1} parent=1 // pred_region
      _
    $region37: #{tpu_custom_call.1} parent=1 // pred_fallthru
      _
    // Predicated region
    $region38: #{tpu_custom_call.1} parent=1 // pred_check
      _
    $region39: #{tpu_custom_call.1} parent=1 // pred_check_branch
      %49 = sbr.rel (0) target = $region41
    $region40: #{tpu_custom_call.1} parent=1 // pred_region
      _
    $region41: #{tpu_custom_call.1} parent=1 // pred_fallthru
      _
    // Predicated region
    $region42: #{tpu_custom_call.1} parent=1 // pred_check
      _
    $region43: #{tpu_custom_call.1} parent=1 // pred_check_branch
      %51 = sbr.rel (0) target = $region45
    $region44: #{tpu_custom_call.1} parent=1 // pred_region
      _
    $region45: #{tpu_custom_call.1} parent=1 // pred_fallthru
      _
    // Predicated region
    $region46: #{tpu_custom_call.1} parent=1 // pred_check
      _
    $region47: #{tpu_custom_call.1} parent=1 // pred_check_branch
      %53 = sbr.rel (0) target = $region49
    $region48: #{tpu_custom_call.1} parent=1 // pred_region
      _
    $region49: #{tpu_custom_call.1} parent=1 // pred_fallthru
      _
    // Predicated region
    $region50: #{tpu_custom_call.1} parent=1 // pred_check
      _
    $region51: #{tpu_custom_call.1} parent=1 // pred_check_branch
      %55 = sbr.rel (0) target = $region53
    $region52: #{tpu_custom_call.1} parent=1 // pred_region
      _
    $region53: #{tpu_custom_call.1} parent=1 // pred_fallthru
      _
    // Predicated region
    $region54: #{tpu_custom_call.1} parent=1 // pred_check
      _
    $region55: #{tpu_custom_call.1} parent=1 // pred_check_branch
      %57 = sbr.rel (0) target = $region57
    $region56: #{tpu_custom_call.1} parent=1 // pred_region
      %58 = dma.done [#allocation3], 256
    $region57: #{tpu_custom_call.1} parent=1 // pred_fallthru
      _
    %v59 = vld [vmem:[#allocation2] sm:$0xff]
    %v60 = vld [vmem:[#allocation2 + $0x8] sm:$0xff]
    %v61 = vld [vmem:[%s1] sm:$0xff]
    %v62 = vld [vmem:[%s1 + $0x8] sm:$0xff]
    %v63 = vld [vmem:[%s1 + $0x10] sm:$0xff]
    %v64 = vld [vmem:[%s1 + $0x18] sm:$0xff]
    %v65 = vld [vmem:[%s5] sm:$0x1]
    %v67 = vlaneseq
    %v68 = vshrl.u32 %v67, 7
    %v69 = vsub.s32 0, %v68
    %v70 = vrot.slane %v65, %v69
    %vm72 = vcmask 261120
    %v74 = vsel %vm72, %v59, 0
    %v77 = vsel %vm72, %v60, 0
    %79 = vmatprep.subr.mxu0 0.0
    %80 = vmatpush1.msra.mxu0 %v61
    %81 = vmatprep.subr.mxu0 0.0
    %82 = vmatpush1.msra.mxu0 %v62
    %83 = vmatprep.subr.mxu0 0.0
    %84 = vmatpush1.msra.mxu0 %v63
    %85 = vmatprep.subr.mxu0 0.0
    %86 = vmatpush1.msra.mxu0 %v64
    %87 = vmatprep.subr.mxu0 0.0
    %88 = vmatpush1.msra.mxu0 0.0
    %89 = vmatprep.subr.mxu0 0.0
    %90 = vmatpush1.msra.mxu0 0.0
    %91 = vmatprep.subr.mxu0 0.0
    %92 = vmatpush1.msra.mxu0 0.0
    %93 = vmatprep.subr.mxu0 0.0
    %94 = vmatpush1.msra.mxu0 0.0
    %95 = vmatprep.subr.mxu0 0.0
    %96 = vmatpush1.msra.mxu0 0.0
    %97 = vmatprep.subr.mxu0 0.0
    %98 = vmatpush1.msra.mxu0 0.0
    %99 = vmatprep.subr.mxu0 0.0
    %100 = vmatpush1.msra.mxu0 0.0
    %101 = vmatprep.subr.mxu0 0.0
    %102 = vmatpush1.msra.mxu0 0.0
    %103 = vmatprep.subr.mxu0 0.0
    %104 = vmatpush1.msra.mxu0 0.0
    %105 = vmatprep.subr.mxu0 0.0
    %106 = vmatpush1.msra.mxu0 0.0
    %107 = vmatprep.subr.mxu0 0.0
    %108 = vmatpush1.msra.mxu0 0.0
    %109 = vmatprep.subr.mxu0 0.0
    %110 = vmatpush1.msra.mxu0 0.0
    %111 = vmatprep.subr.mxu0 0.0
    %112 = vmatpush1.msra.mxu0 0.0
    %113 = vmatprep.subr.mxu0 0.0
    %114 = vmatpush1.msra.mxu0 0.0
    %115 = vmatprep.subr.mxu0 0.0
    %116 = vmatpush1.msra.mxu0 0.0
    %117 = vmatprep.subr.mxu0 0.0
    %118 = vmatpush1.msra.mxu0 0.0
    %119 = vmatprep.subr.mxu0 0.0
    %120 = vmatpush1.msra.mxu0 0.0
    %121 = vmatprep.subr.mxu0 0.0
    %122 = vmatpush1.msra.mxu0 0.0
    %123 = vmatprep.subr.mxu0 0.0
    %124 = vmatpush1.msra.mxu0 0.0
    %125 = vmatprep.subr.mxu0 0.0
    %126 = vmatpush1.msra.mxu0 0.0
    %127 = vmatprep.subr.mxu0 0.0
    %128 = vmatpush1.msra.mxu0 0.0
    %129 = vmatprep.subr.mxu0 0.0
    %130 = vmatpush1.msra.mxu0 0.0
    %131 = vmatprep.subr.mxu0 0.0
    %132 = vmatpush1.msra.mxu0 0.0
    %133 = vmatprep.subr.mxu0 0.0
    %134 = vmatpush1.msra.mxu0 0.0
    %135 = vmatprep.subr.mxu0 0.0
    %136 = vmatpush1.msra.mxu0 0.0
    %137 = vmatprep.subr.mxu0 0.0
    %138 = vmatpush1.msra.mxu0 0.0
    %139 = vmatprep.subr.mxu0 0.0
    %140 = vmatpush1.msra.mxu0 0.0
    %141 = vmatprep.subr.mxu0 0.0
    %142 = vmatpush1.msra.mxu0 0.0
    %143 = vmatprep.mubr.f32.mxu0 0.0
    %144 = vmatmul.mubr.f32.gmra.mrb[0].mxu0 %v74
    %v145 = vpop.f32.mrb[0].mxu0
    %v146 = vadd.f32 %v70, %v145
    %v147 = vpop.f32.mrb[0].mxu0
    %148 = vmatprep.mubr.f32.mxu0 0.0
    %149 = vmatmul.mubr.f32.gmra.mrb[0].mxu0 %v77
    %v150 = vpop.f32.mrb[0].mxu0
    %v151 = vadd.f32 %v70, %v150
    %v152 = vpop.f32.mrb[0].mxu0
    %153 = vdwg.mxu0
    %v154 = vmul.f32 %v146, 0.35355338
    %156 = vrot.lane.b32.xlu0 %v146, 96
    %v157 = vpop.permute.xlu0 %156
    %vm158 = vcmask 64512
    %v160 = vsel %vm158, %v154, 0
    %v162 = vsel %vm158, %v157, 0
    %164 = vmatprep.subr.mxu0 0.0
    %165 = vmatpush1.xpose.msra.mxu0 %v162
    %166 = vmatprep.subr.mxu0 0.0
    %167 = vmatpush1.xpose.msra.mxu0 0.0
    %168 = vmatprep.subr.mxu0 0.0
    %169 = vmatpush1.xpose.msra.mxu0 0.0
    %170 = vmatprep.subr.mxu0 0.0
    %171 = vmatpush1.xpose.msra.mxu0 0.0
    %172 = vmatprep.subr.mxu0 0.0
    %173 = vmatpush1.xpose.msra.mxu0 0.0
    %174 = vmatprep.subr.mxu0 0.0
    %175 = vmatpush1.xpose.msra.mxu0 0.0
    %176 = vmatprep.subr.mxu0 0.0
    %177 = vmatpush1.xpose.msra.mxu0 0.0
    %178 = vmatprep.subr.mxu0 0.0
    %179 = vmatpush1.xpose.msra.mxu0 0.0
    %180 = vmatprep.subr.mxu0 0.0
    %181 = vmatpush1.xpose.msra.mxu0 0.0
    %182 = vmatprep.subr.mxu0 0.0
    %183 = vmatpush1.xpose.msra.mxu0 0.0
    %184 = vmatprep.subr.mxu0 0.0
    %185 = vmatpush1.xpose.msra.mxu0 0.0
    %186 = vmatprep.subr.mxu0 0.0
    %187 = vmatpush1.xpose.msra.mxu0 0.0
    %188 = vmatprep.subr.mxu0 0.0
    %189 = vmatpush1.xpose.msra.mxu0 0.0
    %190 = vmatprep.subr.mxu0 0.0
    %191 = vmatpush1.xpose.msra.mxu0 0.0
    %192 = vmatprep.subr.mxu0 0.0
    %193 = vmatpush1.xpose.msra.mxu0 0.0
    %194 = vmatprep.subr.mxu0 0.0
    %195 = vmatpush1.xpose.msra.mxu0 0.0
    %196 = vmatprep.subr.mxu0 0.0
    %197 = vmatpush1.xpose.msra.mxu0 0.0
    %198 = vmatprep.subr.mxu0 0.0
    %199 = vmatpush1.xpose.msra.mxu0 0.0
    %200 = vmatprep.subr.mxu0 0.0
    %201 = vmatpush1.xpose.msra.mxu0 0.0
    %202 = vmatprep.subr.mxu0 0.0
    %203 = vmatpush1.xpose.msra.mxu0 0.0
    %204 = vmatprep.subr.mxu0 0.0
    %205 = vmatpush1.xpose.msra.mxu0 0.0
    %206 = vmatprep.subr.mxu0 0.0
    %207 = vmatpush1.xpose.msra.mxu0 0.0
    %208 = vmatprep.subr.mxu0 0.0
    %209 = vmatpush1.xpose.msra.mxu0 0.0
    %210 = vmatprep.subr.mxu0 0.0
    %211 = vmatpush1.xpose.msra.mxu0 0.0
    %212 = vmatprep.subr.mxu0 0.0
    %213 = vmatpush1.xpose.msra.mxu0 0.0
    %214 = vmatprep.subr.mxu0 0.0
    %215 = vmatpush1.xpose.msra.mxu0 0.0
    %216 = vmatprep.subr.mxu0 0.0
    %217 = vmatpush1.xpose.msra.mxu0 0.0
    %218 = vmatprep.subr.mxu0 0.0
    %219 = vmatpush1.xpose.msra.mxu0 0.0
    %220 = vmatprep.subr.mxu0 0.0
    %221 = vmatpush1.xpose.msra.mxu0 0.0
    %222 = vmatprep.subr.mxu0 0.0
    %223 = vmatpush1.xpose.msra.mxu0 0.0
    %224 = vmatprep.subr.mxu0 0.0
    %225 = vmatpush1.xpose.msra.mxu0 0.0
    %226 = vmatprep.subr.mxu0 0.0
    %227 = vmatpush1.xpose.msra.mxu0 0.0
    %228 = vmatprep.mubr.f32.mxu0 0.0
    %229 = vmatmul.mubr.f32.gmra.mrb[0].mxu0 %v160
    %v230 = vpop.f32.mrb[0].mxu0
    %v231 = vadd.f32 0.0, %v230
    %v232 = vpop.f32.mrb[0].mxu0
    %233 = vdwg.mxu0
    %v234 = vsel %vm158, %v231, -inf
    %235 = vmax.xlane.f32.xlu0 %v234
    %v236 = vpop.xlane.xlu0 %235
    %v237 = vsub.f32 %v231, %v236
    %v238 = vmul.f32 %v237, 1.442695
    %v239 = vpow.pop %v238
    %v240 = vsel %vm158, %v239, 0.0
    %241 = vadd.xlane.f32.xlu0 %v240
    %v242 = vpop.xlane.xlu0 %241
    %243 = vrot.lane.b32.xlu0 %v146, 64
    %v244 = vpop.permute.xlu0 %243
    %v247 = vsel %vm158, %v239, 0
    %249 = vmatprep.subr.mxu0 0.0
    %250 = vmatpush1.msra.mxu0 %v244
    %251 = vmatprep.subr.mxu0 0.0
    %252 = vmatpush1.msra.mxu0 0.0
    %253 = vmatprep.subr.mxu0 0.0
    %254 = vmatpush1.msra.mxu0 0.0
    %255 = vmatprep.subr.mxu0 0.0
    %256 = vmatpush1.msra.mxu0 0.0
    %257 = vmatprep.subr.mxu0 0.0
    %258 = vmatpush1.msra.mxu0 0.0
    %259 = vmatprep.subr.mxu0 0.0
    %260 = vmatpush1.msra.mxu0 0.0
    %261 = vmatprep.subr.mxu0 0.0
    %262 = vmatpush1.msra.mxu0 0.0
    %263 = vmatprep.subr.mxu0 0.0
    %264 = vmatpush1.msra.mxu0 0.0
    %265 = vmatprep.subr.mxu0 0.0
    %266 = vmatpush1.msra.mxu0 0.0
    %267 = vmatprep.subr.mxu0 0.0
    %268 = vmatpush1.msra.mxu0 0.0
    %269 = vmatprep.subr.mxu0 0.0
    %270 = vmatpush1.msra.mxu0 0.0
    %271 = vmatprep.subr.mxu0 0.0
    %272 = vmatpush1.msra.mxu0 0.0
    %273 = vmatprep.subr.mxu0 0.0
    %274 = vmatpush1.msra.mxu0 0.0
    %275 = vmatprep.subr.mxu0 0.0
    %276 = vmatpush1.msra.mxu0 0.0
    %277 = vmatprep.subr.mxu0 0.0
    %278 = vmatpush1.msra.mxu0 0.0
    %279 = vmatprep.subr.mxu0 0.0
    %280 = vmatpush1.msra.mxu0 0.0
    %281 = vmatprep.subr.mxu0 0.0
    %282 = vmatpush1.msra.mxu0 0.0
    %283 = vmatprep.subr.mxu0 0.0
    %284 = vmatpush1.msra.mxu0 0.0
    %285 = vmatprep.subr.mxu0 0.0
    %286 = vmatpush1.msra.mxu0 0.0
    %287 = vmatprep.subr.mxu0 0.0
    %288 = vmatpush1.msra.mxu0 0.0
    %289 = vmatprep.subr.mxu0 0.0
    %290 = vmatpush1.msra.mxu0 0.0
    %291 = vmatprep.subr.mxu0 0.0
    %292 = vmatpush1.msra.mxu0 0.0
    %293 = vmatprep.subr.mxu0 0.0
    %294 = vmatpush1.msra.mxu0 0.0
    %295 = vmatprep.subr.mxu0 0.0
    %296 = vmatpush1.msra.mxu0 0.0
    %297 = vmatprep.subr.mxu0 0.0
    %298 = vmatpush1.msra.mxu0 0.0
    %299 = vmatprep.subr.mxu0 0.0
    %300 = vmatpush1.msra.mxu0 0.0
    %301 = vmatprep.subr.mxu0 0.0
    %302 = vmatpush1.msra.mxu0 0.0
    %303 = vmatprep.subr.mxu0 0.0
    %304 = vmatpush1.msra.mxu0 0.0
    %305 = vmatprep.subr.mxu0 0.0
    %306 = vmatpush1.msra.mxu0 0.0
    %307 = vmatprep.subr.mxu0 0.0
    %308 = vmatpush1.msra.mxu0 0.0
    %309 = vmatprep.subr.mxu0 0.0
    %310 = vmatpush1.msra.mxu0 0.0
    %311 = vmatprep.subr.mxu0 0.0
    %312 = vmatpush1.msra.mxu0 0.0
    %313 = vmatprep.mubr.f32.mxu0 0.0
    %314 = vmatmul.mubr.f32.gmra.mrb[0].mxu0 %v247
    %v315 = vpop.f32.mrb[0].mxu0
    %v316 = vadd.f32 0.0, %v315
    %v317 = vpop.f32.mrb[0].mxu0
    %318 = vdwg.mxu0
    %v319 = vrcp.pop %v242
    %v320 = vmul.f32 %v316, %v319
    %v321 = vld [vmem:[%s2] sm:$0xff]
    %322 = vrot.lane.b32.xlu0 %v154, 120
    %v323 = vpop.permute.xlu0 %322
    %324 = vrot.lane.b32.xlu0 %v146, 88
    %v325 = vpop.permute.xlu0 %324
    %v326 = vsel %vm158, %v323, 0
    %v328 = vsel %vm158, %v325, 0
    %330 = vmatprep.subr.mxu0 0.0
    %331 = vmatpush1.xpose.msra.mxu0 %v328
    %332 = vmatprep.subr.mxu0 0.0
    %333 = vmatpush1.xpose.msra.mxu0 0.0
    %334 = vmatprep.subr.mxu0 0.0
    %335 = vmatpush1.xpose.msra.mxu0 0.0
    %336 = vmatprep.subr.mxu0 0.0
    %337 = vmatpush1.xpose.msra.mxu0 0.0
    %338 = vmatprep.subr.mxu0 0.0
    %339 = vmatpush1.xpose.msra.mxu0 0.0
    %340 = vmatprep.subr.mxu0 0.0
    %341 = vmatpush1.xpose.msra.mxu0 0.0
    %342 = vmatprep.subr.mxu0 0.0
    %343 = vmatpush1.xpose.msra.mxu0 0.0
    %344 = vmatprep.subr.mxu0 0.0
    %345 = vmatpush1.xpose.msra.mxu0 0.0
    %346 = vmatprep.subr.mxu0 0.0
    %347 = vmatpush1.xpose.msra.mxu0 0.0
    %348 = vmatprep.subr.mxu0 0.0
    %349 = vmatpush1.xpose.msra.mxu0 0.0
    %350 = vmatprep.subr.mxu0 0.0
    %351 = vmatpush1.xpose.msra.mxu0 0.0
    %352 = vmatprep.subr.mxu0 0.0
    %353 = vmatpush1.xpose.msra.mxu0 0.0
    %354 = vmatprep.subr.mxu0 0.0
    %355 = vmatpush1.xpose.msra.mxu0 0.0
    %356 = vmatprep.subr.mxu0 0.0
    %357 = vmatpush1.xpose.msra.mxu0 0.0
    %358 = vmatprep.subr.mxu0 0.0
    %359 = vmatpush1.xpose.msra.mxu0 0.0
    %360 = vmatprep.subr.mxu0 0.0
    %361 = vmatpush1.xpose.msra.mxu0 0.0
    %362 = vmatprep.subr.mxu0 0.0
    %363 = vmatpush1.xpose.msra.mxu0 0.0
    %364 = vmatprep.subr.mxu0 0.0
    %365 = vmatpush1.xpose.msra.mxu0 0.0
    %366 = vmatprep.subr.mxu0 0.0
    %367 = vmatpush1.xpose.msra.mxu0 0.0
    %368 = vmatprep.subr.mxu0 0.0
    %369 = vmatpush1.xpose.msra.mxu0 0.0
    %370 = vmatprep.subr.mxu0 0.0
    %371 = vmatpush1.xpose.msra.mxu0 0.0
    %372 = vmatprep.subr.mxu0 0.0
    %373 = vmatpush1.xpose.msra.mxu0 0.0
    %374 = vmatprep.subr.mxu0 0.0
    %375 = vmatpush1.xpose.msra.mxu0 0.0
    %376 = vmatprep.subr.mxu0 0.0
    %377 = vmatpush1.xpose.msra.mxu0 0.0
    %378 = vmatprep.subr.mxu0 0.0
    %379 = vmatpush1.xpose.msra.mxu0 0.0
    %380 = vmatprep.subr.mxu0 0.0
    %381 = vmatpush1.xpose.msra.mxu0 0.0
    %382 = vmatprep.subr.mxu0 0.0
    %383 = vmatpush1.xpose.msra.mxu0 0.0
    %384 = vmatprep.subr.mxu0 0.0
    %385 = vmatpush1.xpose.msra.mxu0 0.0
    %386 = vmatprep.subr.mxu0 0.0
    %387 = vmatpush1.xpose.msra.mxu0 0.0
    %388 = vmatprep.subr.mxu0 0.0
    %389 = vmatpush1.xpose.msra.mxu0 0.0
    %390 = vmatprep.subr.mxu0 0.0
    %391 = vmatpush1.xpose.msra.mxu0 0.0
    %392 = vmatprep.subr.mxu0 0.0
    %393 = vmatpush1.xpose.msra.mxu0 0.0
    %394 = vmatprep.mubr.f32.mxu0 0.0
    %395 = vmatmul.mubr.f32.gmra.mrb[0].mxu0 %v326
    %v396 = vpop.f32.mrb[0].mxu0
    %v397 = vadd.f32 0.0, %v396
    %v398 = vpop.f32.mrb[0].mxu0
    %399 = vdwg.mxu0
    %v400 = vsel %vm158, %v397, -inf
    %401 = vmax.xlane.f32.xlu0 %v400
    %v402 = vpop.xlane.xlu0 %401
    %v403 = vsub.f32 %v397, %v402
    %v404 = vmul.f32 %v403, 1.442695
    %v405 = vpow.pop %v404
    %v406 = vsel %vm158, %v405, 0.0
    %407 = vadd.xlane.f32.xlu0 %v406
    %v408 = vpop.xlane.xlu0 %407
    %409 = vrot.lane.b32.xlu0 %v146, 56
    %v410 = vpop.permute.xlu0 %409
    %v413 = vsel %vm158, %v405, 0
    %415 = vmatprep.subr.mxu0 0.0
    %416 = vmatpush1.msra.mxu0 %v410
    %417 = vmatprep.subr.mxu0 0.0
    %418 = vmatpush1.msra.mxu0 0.0
    %419 = vmatprep.subr.mxu0 0.0
    %420 = vmatpush1.msra.mxu0 0.0
    %421 = vmatprep.subr.mxu0 0.0
    %422 = vmatpush1.msra.mxu0 0.0
    %423 = vmatprep.subr.mxu0 0.0
    %424 = vmatpush1.msra.mxu0 0.0
    %425 = vmatprep.subr.mxu0 0.0
    %426 = vmatpush1.msra.mxu0 0.0
    %427 = vmatprep.subr.mxu0 0.0
    %428 = vmatpush1.msra.mxu0 0.0
    %429 = vmatprep.subr.mxu0 0.0
    %430 = vmatpush1.msra.mxu0 0.0
    %431 = vmatprep.subr.mxu0 0.0
    %432 = vmatpush1.msra.mxu0 0.0
    %433 = vmatprep.subr.mxu0 0.0
    %434 = vmatpush1.msra.mxu0 0.0
    %435 = vmatprep.subr.mxu0 0.0
    %436 = vmatpush1.msra.mxu0 0.0
    %437 = vmatprep.subr.mxu0 0.0
    %438 = vmatpush1.msra.mxu0 0.0
    %439 = vmatprep.subr.mxu0 0.0
    %440 = vmatpush1.msra.mxu0 0.0
    %441 = vmatprep.subr.mxu0 0.0
    %442 = vmatpush1.msra.mxu0 0.0
    %443 = vmatprep.subr.mxu0 0.0
    %444 = vmatpush1.msra.mxu0 0.0
    %445 = vmatprep.subr.mxu0 0.0
    %446 = vmatpush1.msra.mxu0 0.0
    %447 = vmatprep.subr.mxu0 0.0
    %448 = vmatpush1.msra.mxu0 0.0
    %449 = vmatprep.subr.mxu0 0.0
    %450 = vmatpush1.msra.mxu0 0.0
    %451 = vmatprep.subr.mxu0 0.0
    %452 = vmatpush1.msra.mxu0 0.0
    %453 = vmatprep.subr.mxu0 0.0
    %454 = vmatpush1.msra.mxu0 0.0
    %455 = vmatprep.subr.mxu0 0.0
    %456 = vmatpush1.msra.mxu0 0.0
    %457 = vmatprep.subr.mxu0 0.0
    %458 = vmatpush1.msra.mxu0 0.0
    %459 = vmatprep.subr.mxu0 0.0
    %460 = vmatpush1.msra.mxu0 0.0
    %461 = vmatprep.subr.mxu0 0.0
    %462 = vmatpush1.msra.mxu0 0.0
    %463 = vmatprep.subr.mxu0 0.0
    %464 = vmatpush1.msra.mxu0 0.0
    %465 = vmatprep.subr.mxu0 0.0
    %466 = vmatpush1.msra.mxu0 0.0
    %467 = vmatprep.subr.mxu0 0.0
    %468 = vmatpush1.msra.mxu0 0.0
    %469 = vmatprep.subr.mxu0 0.0
    %470 = vmatpush1.msra.mxu0 0.0
    %471 = vmatprep.subr.mxu0 0.0
    %472 = vmatpush1.msra.mxu0 0.0
    %473 = vmatprep.subr.mxu0 0.0
    %474 = vmatpush1.msra.mxu0 0.0
    %475 = vmatprep.subr.mxu0 0.0
    %476 = vmatpush1.msra.mxu0 0.0
    %477 = vmatprep.subr.mxu0 0.0
    %478 = vmatpush1.msra.mxu0 0.0
    %479 = vmatprep.mubr.f32.mxu0 0.0
    %480 = vmatmul.mubr.f32.gmra.mrb[0].mxu0 %v413
    %v481 = vpop.f32.mrb[0].mxu0
    %v482 = vadd.f32 0.0, %v481
    %v483 = vpop.f32.mrb[0].mxu0
    %484 = vdwg.mxu0
    %v485 = vrcp.pop %v408
    %v486 = vmul.f32 %v482, %v485
    %s487 = scalar_lea.vmem %s2, 8
    %v488 = vld [vmem:[%s487] sm:$0xff]
    %v490 = vsel %vm158, %v486, 0
    %492 = vmatprep.subr.mxu0 0.0
    %493 = vmatpush1.msra.mxu0 %v488
    %494 = vmatprep.subr.mxu0 0.0
    %495 = vmatpush1.msra.mxu0 0.0
    %496 = vmatprep.subr.mxu0 0.0
    %497 = vmatpush1.msra.mxu0 0.0
    %498 = vmatprep.subr.mxu0 0.0
    %499 = vmatpush1.msra.mxu0 0.0
    %500 = vmatprep.subr.mxu0 0.0
    %501 = vmatpush1.msra.mxu0 0.0
    %502 = vmatprep.subr.mxu0 0.0
    %503 = vmatpush1.msra.mxu0 0.0
    %504 = vmatprep.subr.mxu0 0.0
    %505 = vmatpush1.msra.mxu0 0.0
    %506 = vmatprep.subr.mxu0 0.0
    %507 = vmatpush1.msra.mxu0 0.0
    %508 = vmatprep.subr.mxu0 0.0
    %509 = vmatpush1.msra.mxu0 0.0
    %510 = vmatprep.subr.mxu0 0.0
    %511 = vmatpush1.msra.mxu0 0.0
    %512 = vmatprep.subr.mxu0 0.0
    %513 = vmatpush1.msra.mxu0 0.0
    %514 = vmatprep.subr.mxu0 0.0
    %515 = vmatpush1.msra.mxu0 0.0
    %516 = vmatprep.subr.mxu0 0.0
    %517 = vmatpush1.msra.mxu0 0.0
    %518 = vmatprep.subr.mxu0 0.0
    %519 = vmatpush1.msra.mxu0 0.0
    %520 = vmatprep.subr.mxu0 0.0
    %521 = vmatpush1.msra.mxu0 0.0
    %522 = vmatprep.subr.mxu0 0.0
    %523 = vmatpush1.msra.mxu0 0.0
    %524 = vmatprep.subr.mxu0 0.0
    %525 = vmatpush1.msra.mxu0 0.0
    %526 = vmatprep.subr.mxu0 0.0
    %527 = vmatpush1.msra.mxu0 0.0
    %528 = vmatprep.subr.mxu0 0.0
    %529 = vmatpush1.msra.mxu0 0.0
    %530 = vmatprep.subr.mxu0 0.0
    %531 = vmatpush1.msra.mxu0 0.0
    %532 = vmatprep.subr.mxu0 0.0
    %533 = vmatpush1.msra.mxu0 0.0
    %534 = vmatprep.subr.mxu0 0.0
    %535 = vmatpush1.msra.mxu0 0.0
    %536 = vmatprep.subr.mxu0 0.0
    %537 = vmatpush1.msra.mxu0 0.0
    %538 = vmatprep.subr.mxu0 0.0
    %539 = vmatpush1.msra.mxu0 0.0
    %540 = vmatprep.subr.mxu0 0.0
    %541 = vmatpush1.msra.mxu0 0.0
    %542 = vmatprep.subr.mxu0 0.0
    %543 = vmatpush1.msra.mxu0 0.0
    %544 = vmatprep.subr.mxu0 0.0
    %545 = vmatpush1.msra.mxu0 0.0
    %546 = vmatprep.subr.mxu0 0.0
    %547 = vmatpush1.msra.mxu0 0.0
    %548 = vmatprep.subr.mxu0 0.0
    %549 = vmatpush1.msra.mxu0 0.0
    %550 = vmatprep.subr.mxu0 0.0
    %551 = vmatpush1.msra.mxu0 0.0
    %552 = vmatprep.subr.mxu0 0.0
    %553 = vmatpush1.msra.mxu0 0.0
    %554 = vmatprep.subr.mxu0 0.0
    %555 = vmatpush1.msra.mxu0 0.0
    %556 = vmatprep.mubr.f32.mxu0 0.0
    %557 = vmatmul.mubr.f32.gmra.mrb[0].mxu0 %v490
    %v558 = vpop.f32.mrb[0].mxu0
    %v559 = vadd.f32 0.0, %v558
    %v560 = vpop.f32.mrb[0].mxu0
    %561 = vdwg.mxu0
    %v563 = vsel %vm158, %v320, 0
    %565 = vmatprep.subr.mxu0 0.0
    %566 = vmatpush1.msra.mxu0 %v321
    %567 = vmatprep.subr.mxu0 0.0
    %568 = vmatpush1.msra.mxu0 0.0
    %569 = vmatprep.subr.mxu0 0.0
    %570 = vmatpush1.msra.mxu0 0.0
    %571 = vmatprep.subr.mxu0 0.0
    %572 = vmatpush1.msra.mxu0 0.0
    %573 = vmatprep.subr.mxu0 0.0
    %574 = vmatpush1.msra.mxu0 0.0
    %575 = vmatprep.subr.mxu0 0.0
    %576 = vmatpush1.msra.mxu0 0.0
    %577 = vmatprep.subr.mxu0 0.0
    %578 = vmatpush1.msra.mxu0 0.0
    %579 = vmatprep.subr.mxu0 0.0
    %580 = vmatpush1.msra.mxu0 0.0
    %581 = vmatprep.subr.mxu0 0.0
    %582 = vmatpush1.msra.mxu0 0.0
    %583 = vmatprep.subr.mxu0 0.0
    %584 = vmatpush1.msra.mxu0 0.0
    %585 = vmatprep.subr.mxu0 0.0
    %586 = vmatpush1.msra.mxu0 0.0
    %587 = vmatprep.subr.mxu0 0.0
    %588 = vmatpush1.msra.mxu0 0.0
    %589 = vmatprep.subr.mxu0 0.0
    %590 = vmatpush1.msra.mxu0 0.0
    %591 = vmatprep.subr.mxu0 0.0
    %592 = vmatpush1.msra.mxu0 0.0
    %593 = vmatprep.subr.mxu0 0.0
    %594 = vmatpush1.msra.mxu0 0.0
    %595 = vmatprep.subr.mxu0 0.0
    %596 = vmatpush1.msra.mxu0 0.0
    %597 = vmatprep.subr.mxu0 0.0
    %598 = vmatpush1.msra.mxu0 0.0
    %599 = vmatprep.subr.mxu0 0.0
    %600 = vmatpush1.msra.mxu0 0.0
    %601 = vmatprep.subr.mxu0 0.0
    %602 = vmatpush1.msra.mxu0 0.0
    %603 = vmatprep.subr.mxu0 0.0
    %604 = vmatpush1.msra.mxu0 0.0
    %605 = vmatprep.subr.mxu0 0.0
    %606 = vmatpush1.msra.mxu0 0.0
    %607 = vmatprep.subr.mxu0 0.0
    %608 = vmatpush1.msra.mxu0 0.0
    %609 = vmatprep.subr.mxu0 0.0
    %610 = vmatpush1.msra.mxu0 0.0
    %611 = vmatprep.subr.mxu0 0.0
    %612 = vmatpush1.msra.mxu0 0.0
    %613 = vmatprep.subr.mxu0 0.0
    %614 = vmatpush1.msra.mxu0 0.0
    %615 = vmatprep.subr.mxu0 0.0
    %616 = vmatpush1.msra.mxu0 0.0
    %617 = vmatprep.subr.mxu0 0.0
    %618 = vmatpush1.msra.mxu0 0.0
    %619 = vmatprep.subr.mxu0 0.0
    %620 = vmatpush1.msra.mxu0 0.0
    %621 = vmatprep.subr.mxu0 0.0
    %622 = vmatpush1.msra.mxu0 0.0
    %623 = vmatprep.subr.mxu0 0.0
    %624 = vmatpush1.msra.mxu0 0.0
    %625 = vmatprep.subr.mxu0 0.0
    %626 = vmatpush1.msra.mxu0 0.0
    %627 = vmatprep.subr.mxu0 0.0
    %628 = vmatpush1.msra.mxu0 0.0
    %629 = vmatprep.mubr.f32.mxu0 0.0
    %630 = vmatmul.mubr.f32.gmra.mrb[0].mxu0 %v563
    %v631 = vpop.f32.mrb[0].mxu0
    %v632 = vadd.f32 %v559, %v631
    %v633 = vpop.f32.mrb[0].mxu0
    %634 = vdwg.mxu0
    %635 = vrot.lane.b32.xlu0 %v154, 112
    %v636 = vpop.permute.xlu0 %635
    %637 = vrot.lane.b32.xlu0 %v146, 80
    %v638 = vpop.permute.xlu0 %637
    %v639 = vsel %vm158, %v636, 0
    %v641 = vsel %vm158, %v638, 0
    %643 = vmatprep.subr.mxu0 0.0
    %644 = vmatpush1.xpose.msra.mxu0 %v641
    %645 = vmatprep.subr.mxu0 0.0
    %646 = vmatpush1.xpose.msra.mxu0 0.0
    %647 = vmatprep.subr.mxu0 0.0
    %648 = vmatpush1.xpose.msra.mxu0 0.0
    %649 = vmatprep.subr.mxu0 0.0
    %650 = vmatpush1.xpose.msra.mxu0 0.0
    %651 = vmatprep.subr.mxu0 0.0
    %652 = vmatpush1.xpose.msra.mxu0 0.0
    %653 = vmatprep.subr.mxu0 0.0
    %654 = vmatpush1.xpose.msra.mxu0 0.0
    %655 = vmatprep.subr.mxu0 0.0
    %656 = vmatpush1.xpose.msra.mxu0 0.0
    %657 = vmatprep.subr.mxu0 0.0
    %658 = vmatpush1.xpose.msra.mxu0 0.0
    %659 = vmatprep.subr.mxu0 0.0
    %660 = vmatpush1.xpose.msra.mxu0 0.0
    %661 = vmatprep.subr.mxu0 0.0
    %662 = vmatpush1.xpose.msra.mxu0 0.0
    %663 = vmatprep.subr.mxu0 0.0
    %664 = vmatpush1.xpose.msra.mxu0 0.0
    %665 = vmatprep.subr.mxu0 0.0
    %666 = vmatpush1.xpose.msra.mxu0 0.0
    %667 = vmatprep.subr.mxu0 0.0
    %668 = vmatpush1.xpose.msra.mxu0 0.0
    %669 = vmatprep.subr.mxu0 0.0
    %670 = vmatpush1.xpose.msra.mxu0 0.0
    %671 = vmatprep.subr.mxu0 0.0
    %672 = vmatpush1.xpose.msra.mxu0 0.0
    %673 = vmatprep.subr.mxu0 0.0
    %674 = vmatpush1.xpose.msra.mxu0 0.0
    %675 = vmatprep.subr.mxu0 0.0
    %676 = vmatpush1.xpose.msra.mxu0 0.0
    %677 = vmatprep.subr.mxu0 0.0
    %678 = vmatpush1.xpose.msra.mxu0 0.0
    %679 = vmatprep.subr.mxu0 0.0
    %680 = vmatpush1.xpose.msra.mxu0 0.0
    %681 = vmatprep.subr.mxu0 0.0
    %682 = vmatpush1.xpose.msra.mxu0 0.0
    %683 = vmatprep.subr.mxu0 0.0
    %684 = vmatpush1.xpose.msra.mxu0 0.0
    %685 = vmatprep.subr.mxu0 0.0
    %686 = vmatpush1.xpose.msra.mxu0 0.0
    %687 = vmatprep.subr.mxu0 0.0
    %688 = vmatpush1.xpose.msra.mxu0 0.0
    %689 = vmatprep.subr.mxu0 0.0
    %690 = vmatpush1.xpose.msra.mxu0 0.0
    %691 = vmatprep.subr.mxu0 0.0
    %692 = vmatpush1.xpose.msra.mxu0 0.0
    %693 = vmatprep.subr.mxu0 0.0
    %694 = vmatpush1.xpose.msra.mxu0 0.0
    %695 = vmatprep.subr.mxu0 0.0
    %696 = vmatpush1.xpose.msra.mxu0 0.0
    %697 = vmatprep.subr.mxu0 0.0
    %698 = vmatpush1.xpose.msra.mxu0 0.0
    %699 = vmatprep.subr.mxu0 0.0
    %700 = vmatpush1.xpose.msra.mxu0 0.0
    %701 = vmatprep.subr.mxu0 0.0
    %702 = vmatpush1.xpose.msra.mxu0 0.0
    %703 = vmatprep.subr.mxu0 0.0
    %704 = vmatpush1.xpose.msra.mxu0 0.0
    %705 = vmatprep.subr.mxu0 0.0
    %706 = vmatpush1.xpose.msra.mxu0 0.0
    %707 = vmatprep.mubr.f32.mxu0 0.0
    %708 = vmatmul.mubr.f32.gmra.mrb[0].mxu0 %v639
    %v709 = vpop.f32.mrb[0].mxu0
    %v710 = vadd.f32 0.0, %v709
    %v711 = vpop.f32.mrb[0].mxu0
    %712 = vdwg.mxu0
    %v713 = vsel %vm158, %v710, -inf
    %714 = vmax.xlane.f32.xlu0 %v713
    %v715 = vpop.xlane.xlu0 %714
    %v716 = vsub.f32 %v710, %v715
    %v717 = vmul.f32 %v716, 1.442695
    %v718 = vpow.pop %v717
    %v719 = vsel %vm158, %v718, 0.0
    %720 = vadd.xlane.f32.xlu0 %v719
    %v721 = vpop.xlane.xlu0 %720
    %722 = vrot.lane.b32.xlu0 %v146, 48
    %v723 = vpop.permute.xlu0 %722
    %v726 = vsel %vm158, %v718, 0
    %728 = vmatprep.subr.mxu0 0.0
    %729 = vmatpush1.msra.mxu0 %v723
    %730 = vmatprep.subr.mxu0 0.0
    %731 = vmatpush1.msra.mxu0 0.0
    %732 = vmatprep.subr.mxu0 0.0
    %733 = vmatpush1.msra.mxu0 0.0
    %734 = vmatprep.subr.mxu0 0.0
    %735 = vmatpush1.msra.mxu0 0.0
    %736 = vmatprep.subr.mxu0 0.0
    %737 = vmatpush1.msra.mxu0 0.0
    %738 = vmatprep.subr.mxu0 0.0
    %739 = vmatpush1.msra.mxu0 0.0
    %740 = vmatprep.subr.mxu0 0.0
    %741 = vmatpush1.msra.mxu0 0.0
    %742 = vmatprep.subr.mxu0 0.0
    %743 = vmatpush1.msra.mxu0 0.0
    %744 = vmatprep.subr.mxu0 0.0
    %745 = vmatpush1.msra.mxu0 0.0
    %746 = vmatprep.subr.mxu0 0.0
    %747 = vmatpush1.msra.mxu0 0.0
    %748 = vmatprep.subr.mxu0 0.0
    %749 = vmatpush1.msra.mxu0 0.0
    %750 = vmatprep.subr.mxu0 0.0
    %751 = vmatpush1.msra.mxu0 0.0
    %752 = vmatprep.subr.mxu0 0.0
    %753 = vmatpush1.msra.mxu0 0.0
    %754 = vmatprep.subr.mxu0 0.0
    %755 = vmatpush1.msra.mxu0 0.0
    %756 = vmatprep.subr.mxu0 0.0
    %757 = vmatpush1.msra.mxu0 0.0
    %758 = vmatprep.subr.mxu0 0.0
    %759 = vmatpush1.msra.mxu0 0.0
    %760 = vmatprep.subr.mxu0 0.0
    %761 = vmatpush1.msra.mxu0 0.0
    %762 = vmatprep.subr.mxu0 0.0
    %763 = vmatpush1.msra.mxu0 0.0
    %764 = vmatprep.subr.mxu0 0.0
    %765 = vmatpush1.msra.mxu0 0.0
    %766 = vmatprep.subr.mxu0 0.0
    %767 = vmatpush1.msra.mxu0 0.0
    %768 = vmatprep.subr.mxu0 0.0
    %769 = vmatpush1.msra.mxu0 0.0
    %770 = vmatprep.subr.mxu0 0.0
    %771 = vmatpush1.msra.mxu0 0.0
    %772 = vmatprep.subr.mxu0 0.0
    %773 = vmatpush1.msra.mxu0 0.0
    %774 = vmatprep.subr.mxu0 0.0
    %775 = vmatpush1.msra.mxu0 0.0
    %776 = vmatprep.subr.mxu0 0.0
    %777 = vmatpush1.msra.mxu0 0.0
    %778 = vmatprep.subr.mxu0 0.0
    %779 = vmatpush1.msra.mxu0 0.0
    %780 = vmatprep.subr.mxu0 0.0
    %781 = vmatpush1.msra.mxu0 0.0
    %782 = vmatprep.subr.mxu0 0.0
    %783 = vmatpush1.msra.mxu0 0.0
    %784 = vmatprep.subr.mxu0 0.0
    %785 = vmatpush1.msra.mxu0 0.0
    %786 = vmatprep.subr.mxu0 0.0
    %787 = vmatpush1.msra.mxu0 0.0
    %788 = vmatprep.subr.mxu0 0.0
    %789 = vmatpush1.msra.mxu0 0.0
    %790 = vmatprep.subr.mxu0 0.0
    %791 = vmatpush1.msra.mxu0 0.0
    %792 = vmatprep.mubr.f32.mxu0 0.0
    %793 = vmatmul.mubr.f32.gmra.mrb[0].mxu0 %v726
    %v794 = vpop.f32.mrb[0].mxu0
    %v795 = vadd.f32 0.0, %v794
    %v796 = vpop.f32.mrb[0].mxu0
    %797 = vdwg.mxu0
    %v798 = vrcp.pop %v721
    %v799 = vmul.f32 %v795, %v798
    %s800 = scalar_lea.vmem %s2, 16
    %v801 = vld [vmem:[%s800] sm:$0xff]
    %v803 = vsel %vm158, %v799, 0
    %805 = vmatprep.subr.mxu0 0.0
    %806 = vmatpush1.msra.mxu0 %v801
    %807 = vmatprep.subr.mxu0 0.0
    %808 = vmatpush1.msra.mxu0 0.0
    %809 = vmatprep.subr.mxu0 0.0
    %810 = vmatpush1.msra.mxu0 0.0
    %811 = vmatprep.subr.mxu0 0.0
    %812 = vmatpush1.msra.mxu0 0.0
    %813 = vmatprep.subr.mxu0 0.0
    %814 = vmatpush1.msra.mxu0 0.0
    %815 = vmatprep.subr.mxu0 0.0
    %816 = vmatpush1.msra.mxu0 0.0
    %817 = vmatprep.subr.mxu0 0.0
    %818 = vmatpush1.msra.mxu0 0.0
    %819 = vmatprep.subr.mxu0 0.0
    %820 = vmatpush1.msra.mxu0 0.0
    %821 = vmatprep.subr.mxu0 0.0
    %822 = vmatpush1.msra.mxu0 0.0
    %823 = vmatprep.subr.mxu0 0.0
    %824 = vmatpush1.msra.mxu0 0.0
    %825 = vmatprep.subr.mxu0 0.0
    %826 = vmatpush1.msra.mxu0 0.0
    %827 = vmatprep.subr.mxu0 0.0
    %828 = vmatpush1.msra.mxu0 0.0
    %829 = vmatprep.subr.mxu0 0.0
    %830 = vmatpush1.msra.mxu0 0.0
    %831 = vmatprep.subr.mxu0 0.0
    %832 = vmatpush1.msra.mxu0 0.0
    %833 = vmatprep.subr.mxu0 0.0
    %834 = vmatpush1.msra.mxu0 0.0
    %835 = vmatprep.subr.mxu0 0.0
    %836 = vmatpush1.msra.mxu0 0.0
    %837 = vmatprep.subr.mxu0 0.0
    %838 = vmatpush1.msra.mxu0 0.0
    %839 = vmatprep.subr.mxu0 0.0
    %840 = vmatpush1.msra.mxu0 0.0
    %841 = vmatprep.subr.mxu0 0.0
    %842 = vmatpush1.msra.mxu0 0.0
    %843 = vmatprep.subr.mxu0 0.0
    %844 = vmatpush1.msra.mxu0 0.0
    %845 = vmatprep.subr.mxu0 0.0
    %846 = vmatpush1.msra.mxu0 0.0
    %847 = vmatprep.subr.mxu0 0.0
    %848 = vmatpush1.msra.mxu0 0.0
    %849 = vmatprep.subr.mxu0 0.0
    %850 = vmatpush1.msra.mxu0 0.0
    %851 = vmatprep.subr.mxu0 0.0
    %852 = vmatpush1.msra.mxu0 0.0
    %853 = vmatprep.subr.mxu0 0.0
    %854 = vmatpush1.msra.mxu0 0.0
    %855 = vmatprep.subr.mxu0 0.0
    %856 = vmatpush1.msra.mxu0 0.0
    %857 = vmatprep.subr.mxu0 0.0
    %858 = vmatpush1.msra.mxu0 0.0
    %859 = vmatprep.subr.mxu0 0.0
    %860 = vmatpush1.msra.mxu0 0.0
    %861 = vmatprep.subr.mxu0 0.0
    %862 = vmatpush1.msra.mxu0 0.0
    %863 = vmatprep.subr.mxu0 0.0
    %864 = vmatpush1.msra.mxu0 0.0
    %865 = vmatprep.subr.mxu0 0.0
    %866 = vmatpush1.msra.mxu0 0.0
    %867 = vmatprep.subr.mxu0 0.0
    %868 = vmatpush1.msra.mxu0 0.0
    %869 = vmatprep.mubr.f32.mxu0 0.0
    %870 = vmatmul.mubr.f32.gmra.mrb[0].mxu0 %v803
    %v871 = vpop.f32.mrb[0].mxu0
    %v872 = vadd.f32 0.0, %v871
    %v873 = vpop.f32.mrb[0].mxu0
    %874 = vdwg.mxu0
    %v875 = vadd.f32 %v632, %v872
    %876 = vrot.lane.b32.xlu0 %v154, 104
    %v877 = vpop.permute.xlu0 %876
    %878 = vrot.lane.b32.xlu0 %v146, 72
    %v879 = vpop.permute.xlu0 %878
    %v880 = vsel %vm158, %v877, 0
    %v882 = vsel %vm158, %v879, 0
    %884 = vmatprep.subr.mxu0 0.0
    %885 = vmatpush1.xpose.msra.mxu0 %v882
    %886 = vmatprep.subr.mxu0 0.0
    %887 = vmatpush1.xpose.msra.mxu0 0.0
    %888 = vmatprep.subr.mxu0 0.0
    %889 = vmatpush1.xpose.msra.mxu0 0.0
    %890 = vmatprep.subr.mxu0 0.0
    %891 = vmatpush1.xpose.msra.mxu0 0.0
    %892 = vmatprep.subr.mxu0 0.0
    %893 = vmatpush1.xpose.msra.mxu0 0.0
    %894 = vmatprep.subr.mxu0 0.0
    %895 = vmatpush1.xpose.msra.mxu0 0.0
    %896 = vmatprep.subr.mxu0 0.0
    %897 = vmatpush1.xpose.msra.mxu0 0.0
    %898 = vmatprep.subr.mxu0 0.0
    %899 = vmatpush1.xpose.msra.mxu0 0.0
    %900 = vmatprep.subr.mxu0 0.0
    %901 = vmatpush1.xpose.msra.mxu0 0.0
    %902 = vmatprep.subr.mxu0 0.0
    %903 = vmatpush1.xpose.msra.mxu0 0.0
    %904 = vmatprep.subr.mxu0 0.0
    %905 = vmatpush1.xpose.msra.mxu0 0.0
    %906 = vmatprep.subr.mxu0 0.0
    %907 = vmatpush1.xpose.msra.mxu0 0.0
    %908 = vmatprep.subr.mxu0 0.0
    %909 = vmatpush1.xpose.msra.mxu0 0.0
    %910 = vmatprep.subr.mxu0 0.0
    %911 = vmatpush1.xpose.msra.mxu0 0.0
    %912 = vmatprep.subr.mxu0 0.0
    %913 = vmatpush1.xpose.msra.mxu0 0.0
    %914 = vmatprep.subr.mxu0 0.0
    %915 = vmatpush1.xpose.msra.mxu0 0.0
    %916 = vmatprep.subr.mxu0 0.0
    %917 = vmatpush1.xpose.msra.mxu0 0.0
    %918 = vmatprep.subr.mxu0 0.0
    %919 = vmatpush1.xpose.msra.mxu0 0.0
    %920 = vmatprep.subr.mxu0 0.0
    %921 = vmatpush1.xpose.msra.mxu0 0.0
    %922 = vmatprep.subr.mxu0 0.0
    %923 = vmatpush1.xpose.msra.mxu0 0.0
    %924 = vmatprep.subr.mxu0 0.0
    %925 = vmatpush1.xpose.msra.mxu0 0.0
    %926 = vmatprep.subr.mxu0 0.0
    %927 = vmatpush1.xpose.msra.mxu0 0.0
    %928 = vmatprep.subr.mxu0 0.0
    %929 = vmatpush1.xpose.msra.mxu0 0.0
    %930 = vmatprep.subr.mxu0 0.0
    %931 = vmatpush1.xpose.msra.mxu0 0.0
    %932 = vmatprep.subr.mxu0 0.0
    %933 = vmatpush1.xpose.msra.mxu0 0.0
    %934 = vmatprep.subr.mxu0 0.0
    %935 = vmatpush1.xpose.msra.mxu0 0.0
    %936 = vmatprep.subr.mxu0 0.0
    %937 = vmatpush1.xpose.msra.mxu0 0.0
    %938 = vmatprep.subr.mxu0 0.0
    %939 = vmatpush1.xpose.msra.mxu0 0.0
    %940 = vmatprep.subr.mxu0 0.0
    %941 = vmatpush1.xpose.msra.mxu0 0.0
    %942 = vmatprep.subr.mxu0 0.0
    %943 = vmatpush1.xpose.msra.mxu0 0.0
    %944 = vmatprep.subr.mxu0 0.0
    %945 = vmatpush1.xpose.msra.mxu0 0.0
    %946 = vmatprep.subr.mxu0 0.0
    %947 = vmatpush1.xpose.msra.mxu0 0.0
    %948 = vmatprep.mubr.f32.mxu0 0.0
    %949 = vmatmul.mubr.f32.gmra.mrb[0].mxu0 %v880
    %v950 = vpop.f32.mrb[0].mxu0
    %v951 = vadd.f32 0.0, %v950
    %v952 = vpop.f32.mrb[0].mxu0
    %953 = vdwg.mxu0
    %v954 = vsel %vm158, %v951, -inf
    %955 = vmax.xlane.f32.xlu0 %v954
    %v956 = vpop.xlane.xlu0 %955
    %v957 = vsub.f32 %v951, %v956
    %v958 = vmul.f32 %v957, 1.442695
    %v959 = vpow.pop %v958
    %v960 = vsel %vm158, %v959, 0.0
    %961 = vadd.xlane.f32.xlu0 %v960
    %v962 = vpop.xlane.xlu0 %961
    %963 = vrot.lane.b32.xlu0 %v146, 40
    %v964 = vpop.permute.xlu0 %963
    %v967 = vsel %vm158, %v959, 0
    %969 = vmatprep.subr.mxu0 0.0
    %970 = vmatpush1.msra.mxu0 %v964
    %971 = vmatprep.subr.mxu0 0.0
    %972 = vmatpush1.msra.mxu0 0.0
    %973 = vmatprep.subr.mxu0 0.0
    %974 = vmatpush1.msra.mxu0 0.0
    %975 = vmatprep.subr.mxu0 0.0
    %976 = vmatpush1.msra.mxu0 0.0
    %977 = vmatprep.subr.mxu0 0.0
    %978 = vmatpush1.msra.mxu0 0.0
    %979 = vmatprep.subr.mxu0 0.0
    %980 = vmatpush1.msra.mxu0 0.0
    %981 = vmatprep.subr.mxu0 0.0
    %982 = vmatpush1.msra.mxu0 0.0
    %983 = vmatprep.subr.mxu0 0.0
    %984 = vmatpush1.msra.mxu0 0.0
    %985 = vmatprep.subr.mxu0 0.0
    %986 = vmatpush1.msra.mxu0 0.0
    %987 = vmatprep.subr.mxu0 0.0
    %988 = vmatpush1.msra.mxu0 0.0
    %989 = vmatprep.subr.mxu0 0.0
    %990 = vmatpush1.msra.mxu0 0.0
    %991 = vmatprep.subr.mxu0 0.0
    %992 = vmatpush1.msra.mxu0 0.0
    %993 = vmatprep.subr.mxu0 0.0
    %994 = vmatpush1.msra.mxu0 0.0
    %995 = vmatprep.subr.mxu0 0.0
    %996 = vmatpush1.msra.mxu0 0.0
    %997 = vmatprep.subr.mxu0 0.0
    %998 = vmatpush1.msra.mxu0 0.0
    %999 = vmatprep.subr.mxu0 0.0
    %1000 = vmatpush1.msra.mxu0 0.0
    %1001 = vmatprep.subr.mxu0 0.0
    %1002 = vmatpush1.msra.mxu0 0.0
    %1003 = vmatprep.subr.mxu0 0.0
    %1004 = vmatpush1.msra.mxu0 0.0
    %1005 = vmatprep.subr.mxu0 0.0
    %1006 = vmatpush1.msra.mxu0 0.0
    %1007 = vmatprep.subr.mxu0 0.0
    %1008 = vmatpush1.msra.mxu0 0.0
    %1009 = vmatprep.subr.mxu0 0.0
    %1010 = vmatpush1.msra.mxu0 0.0
    %1011 = vmatprep.subr.mxu0 0.0
    %1012 = vmatpush1.msra.mxu0 0.0
    %1013 = vmatprep.subr.mxu0 0.0
    %1014 = vmatpush1.msra.mxu0 0.0
    %1015 = vmatprep.subr.mxu0 0.0
    %1016 = vmatpush1.msra.mxu0 0.0
    %1017 = vmatprep.subr.mxu0 0.0
    %1018 = vmatpush1.msra.mxu0 0.0
    %1019 = vmatprep.subr.mxu0 0.0
    %1020 = vmatpush1.msra.mxu0 0.0
    %1021 = vmatprep.subr.mxu0 0.0
    %1022 = vmatpush1.msra.mxu0 0.0
    %1023 = vmatprep.subr.mxu0 0.0
    %1024 = vmatpush1.msra.mxu0 0.0
    %1025 = vmatprep.subr.mxu0 0.0
    %1026 = vmatpush1.msra.mxu0 0.0
    %1027 = vmatprep.subr.mxu0 0.0
    %1028 = vmatpush1.msra.mxu0 0.0
    %1029 = vmatprep.subr.mxu0 0.0
    %1030 = vmatpush1.msra.mxu0 0.0
    %1031 = vmatprep.subr.mxu0 0.0
    %1032 = vmatpush1.msra.mxu0 0.0
    %1033 = vmatprep.mubr.f32.mxu0 0.0
    %1034 = vmatmul.mubr.f32.gmra.mrb[0].mxu0 %v967
    %v1035 = vpop.f32.mrb[0].mxu0
    %v1036 = vadd.f32 0.0, %v1035
    %v1037 = vpop.f32.mrb[0].mxu0
    %1038 = vdwg.mxu0
    %v1039 = vrcp.pop %v962
    %v1040 = vmul.f32 %v1036, %v1039
    %s1041 = scalar_lea.vmem %s2, 24
    %v1042 = vld [vmem:[%s1041] sm:$0xff]
    %v1044 = vsel %vm158, %v1040, 0
    %1046 = vmatprep.subr.mxu0 0.0
    %1047 = vmatpush1.msra.mxu0 %v1042
    %1048 = vmatprep.subr.mxu0 0.0
    %1049 = vmatpush1.msra.mxu0 0.0
    %1050 = vmatprep.subr.mxu0 0.0
    %1051 = vmatpush1.msra.mxu0 0.0
    %1052 = vmatprep.subr.mxu0 0.0
    %1053 = vmatpush1.msra.mxu0 0.0
    %1054 = vmatprep.subr.mxu0 0.0
    %1055 = vmatpush1.msra.mxu0 0.0
    %1056 = vmatprep.subr.mxu0 0.0
    %1057 = vmatpush1.msra.mxu0 0.0
    %1058 = vmatprep.subr.mxu0 0.0
    %1059 = vmatpush1.msra.mxu0 0.0
    %1060 = vmatprep.subr.mxu0 0.0
    %1061 = vmatpush1.msra.mxu0 0.0
    %1062 = vmatprep.subr.mxu0 0.0
    %1063 = vmatpush1.msra.mxu0 0.0
    %1064 = vmatprep.subr.mxu0 0.0
    %1065 = vmatpush1.msra.mxu0 0.0
    %1066 = vmatprep.subr.mxu0 0.0
    %1067 = vmatpush1.msra.mxu0 0.0
    %1068 = vmatprep.subr.mxu0 0.0
    %1069 = vmatpush1.msra.mxu0 0.0
    %1070 = vmatprep.subr.mxu0 0.0
    %1071 = vmatpush1.msra.mxu0 0.0
    %1072 = vmatprep.subr.mxu0 0.0
    %1073 = vmatpush1.msra.mxu0 0.0
    %1074 = vmatprep.subr.mxu0 0.0
    %1075 = vmatpush1.msra.mxu0 0.0
    %1076 = vmatprep.subr.mxu0 0.0
    %1077 = vmatpush1.msra.mxu0 0.0
    %1078 = vmatprep.subr.mxu0 0.0
    %1079 = vmatpush1.msra.mxu0 0.0
    %1080 = vmatprep.subr.mxu0 0.0
    %1081 = vmatpush1.msra.mxu0 0.0
    %1082 = vmatprep.subr.mxu0 0.0
    %1083 = vmatpush1.msra.mxu0 0.0
    %1084 = vmatprep.subr.mxu0 0.0
    %1085 = vmatpush1.msra.mxu0 0.0
    %1086 = vmatprep.subr.mxu0 0.0
    %1087 = vmatpush1.msra.mxu0 0.0
    %1088 = vmatprep.subr.mxu0 0.0
    %1089 = vmatpush1.msra.mxu0 0.0
    %1090 = vmatprep.subr.mxu0 0.0
    %1091 = vmatpush1.msra.mxu0 0.0
    %1092 = vmatprep.subr.mxu0 0.0
    %1093 = vmatpush1.msra.mxu0 0.0
    %1094 = vmatprep.subr.mxu0 0.0
    %1095 = vmatpush1.msra.mxu0 0.0
    %1096 = vmatprep.subr.mxu0 0.0
    %1097 = vmatpush1.msra.mxu0 0.0
    %1098 = vmatprep.subr.mxu0 0.0
    %1099 = vmatpush1.msra.mxu0 0.0
    %1100 = vmatprep.subr.mxu0 0.0
    %1101 = vmatpush1.msra.mxu0 0.0
    %1102 = vmatprep.subr.mxu0 0.0
    %1103 = vmatpush1.msra.mxu0 0.0
    %1104 = vmatprep.subr.mxu0 0.0
    %1105 = vmatpush1.msra.mxu0 0.0
    %1106 = vmatprep.subr.mxu0 0.0
    %1107 = vmatpush1.msra.mxu0 0.0
    %1108 = vmatprep.subr.mxu0 0.0
    %1109 = vmatpush1.msra.mxu0 0.0
    %1110 = vmatprep.mubr.f32.mxu0 0.0
    %1111 = vmatmul.mubr.f32.gmra.mrb[0].mxu0 %v1044
    %v1112 = vpop.f32.mrb[0].mxu0
    %v1113 = vadd.f32 0.0, %v1112
    %v1114 = vpop.f32.mrb[0].mxu0
    %1115 = vdwg.mxu0
    %v1116 = vadd.f32 %v875, %v1113
    %v1117 = vmul.f32 %v151, 0.35355338
    %1119 = vrot.lane.b32.xlu0 %v151, 96
    %v1120 = vpop.permute.xlu0 %1119
    %v1122 = vsel %vm158, %v1117, 0
    %v1124 = vsel %vm158, %v1120, 0
    %1126 = vmatprep.subr.mxu0 0.0
    %1127 = vmatpush1.xpose.msra.mxu0 %v1124
    %1128 = vmatprep.subr.mxu0 0.0
    %1129 = vmatpush1.xpose.msra.mxu0 0.0
    %1130 = vmatprep.subr.mxu0 0.0
    %1131 = vmatpush1.xpose.msra.mxu0 0.0
    %1132 = vmatprep.subr.mxu0 0.0
    %1133 = vmatpush1.xpose.msra.mxu0 0.0
    %1134 = vmatprep.subr.mxu0 0.0
    %1135 = vmatpush1.xpose.msra.mxu0 0.0
    %1136 = vmatprep.subr.mxu0 0.0
    %1137 = vmatpush1.xpose.msra.mxu0 0.0
    %1138 = vmatprep.subr.mxu0 0.0
    %1139 = vmatpush1.xpose.msra.mxu0 0.0
    %1140 = vmatprep.subr.mxu0 0.0
    %1141 = vmatpush1.xpose.msra.mxu0 0.0
    %1142 = vmatprep.subr.mxu0 0.0
    %1143 = vmatpush1.xpose.msra.mxu0 0.0
    %1144 = vmatprep.subr.mxu0 0.0
    %1145 = vmatpush1.xpose.msra.mxu0 0.0
    %1146 = vmatprep.subr.mxu0 0.0
    %1147 = vmatpush1.xpose.msra.mxu0 0.0
    %1148 = vmatprep.subr.mxu0 0.0
    %1149 = vmatpush1.xpose.msra.mxu0 0.0
    %1150 = vmatprep.subr.mxu0 0.0
    %1151 = vmatpush1.xpose.msra.mxu0 0.0
    %1152 = vmatprep.subr.mxu0 0.0
    %1153 = vmatpush1.xpose.msra.mxu0 0.0
    %1154 = vmatprep.subr.mxu0 0.0
    %1155 = vmatpush1.xpose.msra.mxu0 0.0
    %1156 = vmatprep.subr.mxu0 0.0
    %1157 = vmatpush1.xpose.msra.mxu0 0.0
    %1158 = vmatprep.subr.mxu0 0.0
    %1159 = vmatpush1.xpose.msra.mxu0 0.0
    %1160 = vmatprep.subr.mxu0 0.0
    %1161 = vmatpush1.xpose.msra.mxu0 0.0
    %1162 = vmatprep.subr.mxu0 0.0
    %1163 = vmatpush1.xpose.msra.mxu0 0.0
    %1164 = vmatprep.subr.mxu0 0.0
    %1165 = vmatpush1.xpose.msra.mxu0 0.0
    %1166 = vmatprep.subr.mxu0 0.0
    %1167 = vmatpush1.xpose.msra.mxu0 0.0
    %1168 = vmatprep.subr.mxu0 0.0
    %1169 = vmatpush1.xpose.msra.mxu0 0.0
    %1170 = vmatprep.subr.mxu0 0.0
    %1171 = vmatpush1.xpose.msra.mxu0 0.0
    %1172 = vmatprep.subr.mxu0 0.0
    %1173 = vmatpush1.xpose.msra.mxu0 0.0
    %1174 = vmatprep.subr.mxu0 0.0
    %1175 = vmatpush1.xpose.msra.mxu0 0.0
    %1176 = vmatprep.subr.mxu0 0.0
    %1177 = vmatpush1.xpose.msra.mxu0 0.0
    %1178 = vmatprep.subr.mxu0 0.0
    %1179 = vmatpush1.xpose.msra.mxu0 0.0
    %1180 = vmatprep.subr.mxu0 0.0
    %1181 = vmatpush1.xpose.msra.mxu0 0.0
    %1182 = vmatprep.subr.mxu0 0.0
    %1183 = vmatpush1.xpose.msra.mxu0 0.0
    %1184 = vmatprep.subr.mxu0 0.0
    %1185 = vmatpush1.xpose.msra.mxu0 0.0
    %1186 = vmatprep.subr.mxu0 0.0
    %1187 = vmatpush1.xpose.msra.mxu0 0.0
    %1188 = vmatprep.subr.mxu0 0.0
    %1189 = vmatpush1.xpose.msra.mxu0 0.0
    %1190 = vmatprep.mubr.f32.mxu0 0.0
    %1191 = vmatmul.mubr.f32.gmra.mrb[0].mxu0 %v1122
    %v1192 = vpop.f32.mrb[0].mxu0
    %v1193 = vadd.f32 0.0, %v1192
    %v1194 = vpop.f32.mrb[0].mxu0
    %1195 = vdwg.mxu0
    %v1196 = vsel %vm158, %v1193, -inf
    %1197 = vmax.xlane.f32.xlu0 %v1196
    %v1198 = vpop.xlane.xlu0 %1197
    %v1199 = vsub.f32 %v1193, %v1198
    %v1200 = vmul.f32 %v1199, 1.442695
    %v1201 = vpow.pop %v1200
    %v1202 = vsel %vm158, %v1201, 0.0
    %1203 = vadd.xlane.f32.xlu0 %v1202
    %v1204 = vpop.xlane.xlu0 %1203
    %1205 = vrot.lane.b32.xlu0 %v151, 64
    %v1206 = vpop.permute.xlu0 %1205
    %v1209 = vsel %vm158, %v1201, 0
    %1211 = vmatprep.subr.mxu0 0.0
    %1212 = vmatpush1.msra.mxu0 %v1206
    %1213 = vmatprep.subr.mxu0 0.0
    %1214 = vmatpush1.msra.mxu0 0.0
    %1215 = vmatprep.subr.mxu0 0.0
    %1216 = vmatpush1.msra.mxu0 0.0
    %1217 = vmatprep.subr.mxu0 0.0
    %1218 = vmatpush1.msra.mxu0 0.0
    %1219 = vmatprep.subr.mxu0 0.0
    %1220 = vmatpush1.msra.mxu0 0.0
    %1221 = vmatprep.subr.mxu0 0.0
    %1222 = vmatpush1.msra.mxu0 0.0
    %1223 = vmatprep.subr.mxu0 0.0
    %1224 = vmatpush1.msra.mxu0 0.0
    %1225 = vmatprep.subr.mxu0 0.0
    %1226 = vmatpush1.msra.mxu0 0.0
    %1227 = vmatprep.subr.mxu0 0.0
    %1228 = vmatpush1.msra.mxu0 0.0
    %1229 = vmatprep.subr.mxu0 0.0
    %1230 = vmatpush1.msra.mxu0 0.0
    %1231 = vmatprep.subr.mxu0 0.0
    %1232 = vmatpush1.msra.mxu0 0.0
    %1233 = vmatprep.subr.mxu0 0.0
    %1234 = vmatpush1.msra.mxu0 0.0
    %1235 = vmatprep.subr.mxu0 0.0
    %1236 = vmatpush1.msra.mxu0 0.0
    %1237 = vmatprep.subr.mxu0 0.0
    %1238 = vmatpush1.msra.mxu0 0.0
    %1239 = vmatprep.subr.mxu0 0.0
    %1240 = vmatpush1.msra.mxu0 0.0
    %1241 = vmatprep.subr.mxu0 0.0
    %1242 = vmatpush1.msra.mxu0 0.0
    %1243 = vmatprep.subr.mxu0 0.0
    %1244 = vmatpush1.msra.mxu0 0.0
    %1245 = vmatprep.subr.mxu0 0.0
    %1246 = vmatpush1.msra.mxu0 0.0
    %1247 = vmatprep.subr.mxu0 0.0
    %1248 = vmatpush1.msra.mxu0 0.0
    %1249 = vmatprep.subr.mxu0 0.0
    %1250 = vmatpush1.msra.mxu0 0.0
    %1251 = vmatprep.subr.mxu0 0.0
    %1252 = vmatpush1.msra.mxu0 0.0
    %1253 = vmatprep.subr.mxu0 0.0
    %1254 = vmatpush1.msra.mxu0 0.0
    %1255 = vmatprep.subr.mxu0 0.0
    %1256 = vmatpush1.msra.mxu0 0.0
    %1257 = vmatprep.subr.mxu0 0.0
    %1258 = vmatpush1.msra.mxu0 0.0
    %1259 = vmatprep.subr.mxu0 0.0
    %1260 = vmatpush1.msra.mxu0 0.0
    %1261 = vmatprep.subr.mxu0 0.0
    %1262 = vmatpush1.msra.mxu0 0.0
    %1263 = vmatprep.subr.mxu0 0.0
    %1264 = vmatpush1.msra.mxu0 0.0
    %1265 = vmatprep.subr.mxu0 0.0
    %1266 = vmatpush1.msra.mxu0 0.0
    %1267 = vmatprep.subr.mxu0 0.0
    %1268 = vmatpush1.msra.mxu0 0.0
    %1269 = vmatprep.subr.mxu0 0.0
    %1270 = vmatpush1.msra.mxu0 0.0
    %1271 = vmatprep.subr.mxu0 0.0
    %1272 = vmatpush1.msra.mxu0 0.0
    %1273 = vmatprep.subr.mxu0 0.0
    %1274 = vmatpush1.msra.mxu0 0.0
    %1275 = vmatprep.mubr.f32.mxu0 0.0
    %1276 = vmatmul.mubr.f32.gmra.mrb[0].mxu0 %v1209
    %v1277 = vpop.f32.mrb[0].mxu0
    %v1278 = vadd.f32 0.0, %v1277
    %v1279 = vpop.f32.mrb[0].mxu0
    %1280 = vdwg.mxu0
    %v1281 = vrcp.pop %v1204
    %v1282 = vmul.f32 %v1278, %v1281
    %1283 = vrot.lane.b32.xlu0 %v1117, 120
    %v1284 = vpop.permute.xlu0 %1283
    %1285 = vrot.lane.b32.xlu0 %v151, 88
    %v1286 = vpop.permute.xlu0 %1285
    %v1287 = vsel %vm158, %v1284, 0
    %v1289 = vsel %vm158, %v1286, 0
    %1291 = vmatprep.subr.mxu0 0.0
    %1292 = vmatpush1.xpose.msra.mxu0 %v1289
    %1293 = vmatprep.subr.mxu0 0.0
    %1294 = vmatpush1.xpose.msra.mxu0 0.0
    %1295 = vmatprep.subr.mxu0 0.0
    %1296 = vmatpush1.xpose.msra.mxu0 0.0
    %1297 = vmatprep.subr.mxu0 0.0
    %1298 = vmatpush1.xpose.msra.mxu0 0.0
    %1299 = vmatprep.subr.mxu0 0.0
    %1300 = vmatpush1.xpose.msra.mxu0 0.0
    %1301 = vmatprep.subr.mxu0 0.0
    %1302 = vmatpush1.xpose.msra.mxu0 0.0
    %1303 = vmatprep.subr.mxu0 0.0
    %1304 = vmatpush1.xpose.msra.mxu0 0.0
    %1305 = vmatprep.subr.mxu0 0.0
    %1306 = vmatpush1.xpose.msra.mxu0 0.0
    %1307 = vmatprep.subr.mxu0 0.0
    %1308 = vmatpush1.xpose.msra.mxu0 0.0
    %1309 = vmatprep.subr.mxu0 0.0
    %1310 = vmatpush1.xpose.msra.mxu0 0.0
    %1311 = vmatprep.subr.mxu0 0.0
    %1312 = vmatpush1.xpose.msra.mxu0 0.0
    %1313 = vmatprep.subr.mxu0 0.0
    %1314 = vmatpush1.xpose.msra.mxu0 0.0
    %1315 = vmatprep.subr.mxu0 0.0
    %1316 = vmatpush1.xpose.msra.mxu0 0.0
    %1317 = vmatprep.subr.mxu0 0.0
    %1318 = vmatpush1.xpose.msra.mxu0 0.0
    %1319 = vmatprep.subr.mxu0 0.0
    %1320 = vmatpush1.xpose.msra.mxu0 0.0
    %1321 = vmatprep.subr.mxu0 0.0
    %1322 = vmatpush1.xpose.msra.mxu0 0.0
    %1323 = vmatprep.subr.mxu0 0.0
    %1324 = vmatpush1.xpose.msra.mxu0 0.0
    %1325 = vmatprep.subr.mxu0 0.0
    %1326 = vmatpush1.xpose.msra.mxu0 0.0
    %1327 = vmatprep.subr.mxu0 0.0
    %1328 = vmatpush1.xpose.msra.mxu0 0.0
    %1329 = vmatprep.subr.mxu0 0.0
    %1330 = vmatpush1.xpose.msra.mxu0 0.0
    %1331 = vmatprep.subr.mxu0 0.0
    %1332 = vmatpush1.xpose.msra.mxu0 0.0
    %1333 = vmatprep.subr.mxu0 0.0
    %1334 = vmatpush1.xpose.msra.mxu0 0.0
    %1335 = vmatprep.subr.mxu0 0.0
    %1336 = vmatpush1.xpose.msra.mxu0 0.0
    %1337 = vmatprep.subr.mxu0 0.0
    %1338 = vmatpush1.xpose.msra.mxu0 0.0
    %1339 = vmatprep.subr.mxu0 0.0
    %1340 = vmatpush1.xpose.msra.mxu0 0.0
    %1341 = vmatprep.subr.mxu0 0.0
    %1342 = vmatpush1.xpose.msra.mxu0 0.0
    %1343 = vmatprep.subr.mxu0 0.0
    %1344 = vmatpush1.xpose.msra.mxu0 0.0
    %1345 = vmatprep.subr.mxu0 0.0
    %1346 = vmatpush1.xpose.msra.mxu0 0.0
    %1347 = vmatprep.subr.mxu0 0.0
    %1348 = vmatpush1.xpose.msra.mxu0 0.0
    %1349 = vmatprep.subr.mxu0 0.0
    %1350 = vmatpush1.xpose.msra.mxu0 0.0
    %1351 = vmatprep.subr.mxu0 0.0
    %1352 = vmatpush1.xpose.msra.mxu0 0.0
    %1353 = vmatprep.subr.mxu0 0.0
    %1354 = vmatpush1.xpose.msra.mxu0 0.0
    %1355 = vmatprep.mubr.f32.mxu0 0.0
    %1356 = vmatmul.mubr.f32.gmra.mrb[0].mxu0 %v1287
    %v1357 = vpop.f32.mrb[0].mxu0
    %v1358 = vadd.f32 0.0, %v1357
    %v1359 = vpop.f32.mrb[0].mxu0
    %1360 = vdwg.mxu0
    %v1361 = vsel %vm158, %v1358, -inf
    %1362 = vmax.xlane.f32.xlu0 %v1361
    %v1363 = vpop.xlane.xlu0 %1362
    %v1364 = vsub.f32 %v1358, %v1363
    %v1365 = vmul.f32 %v1364, 1.442695
    %v1366 = vpow.pop %v1365
    %v1367 = vsel %vm158, %v1366, 0.0
    %1368 = vadd.xlane.f32.xlu0 %v1367
    %v1369 = vpop.xlane.xlu0 %1368
    %1370 = vrot.lane.b32.xlu0 %v151, 56
    %v1371 = vpop.permute.xlu0 %1370
    %v1374 = vsel %vm158, %v1366, 0
    %1376 = vmatprep.subr.mxu0 0.0
    %1377 = vmatpush1.msra.mxu0 %v1371
    %1378 = vmatprep.subr.mxu0 0.0
    %1379 = vmatpush1.msra.mxu0 0.0
    %1380 = vmatprep.subr.mxu0 0.0
    %1381 = vmatpush1.msra.mxu0 0.0
    %1382 = vmatprep.subr.mxu0 0.0
    %1383 = vmatpush1.msra.mxu0 0.0
    %1384 = vmatprep.subr.mxu0 0.0
    %1385 = vmatpush1.msra.mxu0 0.0
    %1386 = vmatprep.subr.mxu0 0.0
    %1387 = vmatpush1.msra.mxu0 0.0
    %1388 = vmatprep.subr.mxu0 0.0
    %1389 = vmatpush1.msra.mxu0 0.0
    %1390 = vmatprep.subr.mxu0 0.0
    %1391 = vmatpush1.msra.mxu0 0.0
    %1392 = vmatprep.subr.mxu0 0.0
    %1393 = vmatpush1.msra.mxu0 0.0
    %1394 = vmatprep.subr.mxu0 0.0
    %1395 = vmatpush1.msra.mxu0 0.0
    %1396 = vmatprep.subr.mxu0 0.0
    %1397 = vmatpush1.msra.mxu0 0.0
    %1398 = vmatprep.subr.mxu0 0.0
    %1399 = vmatpush1.msra.mxu0 0.0
    %1400 = vmatprep.subr.mxu0 0.0
    %1401 = vmatpush1.msra.mxu0 0.0
    %1402 = vmatprep.subr.mxu0 0.0
    %1403 = vmatpush1.msra.mxu0 0.0
    %1404 = vmatprep.subr.mxu0 0.0
    %1405 = vmatpush1.msra.mxu0 0.0
    %1406 = vmatprep.subr.mxu0 0.0
    %1407 = vmatpush1.msra.mxu0 0.0
    %1408 = vmatprep.subr.mxu0 0.0
    %1409 = vmatpush1.msra.mxu0 0.0
    %1410 = vmatprep.subr.mxu0 0.0
    %1411 = vmatpush1.msra.mxu0 0.0
    %1412 = vmatprep.subr.mxu0 0.0
    %1413 = vmatpush1.msra.mxu0 0.0
    %1414 = vmatprep.subr.mxu0 0.0
    %1415 = vmatpush1.msra.mxu0 0.0
    %1416 = vmatprep.subr.mxu0 0.0
    %1417 = vmatpush1.msra.mxu0 0.0
    %1418 = vmatprep.subr.mxu0 0.0
    %1419 = vmatpush1.msra.mxu0 0.0
    %1420 = vmatprep.subr.mxu0 0.0
    %1421 = vmatpush1.msra.mxu0 0.0
    %1422 = vmatprep.subr.mxu0 0.0
    %1423 = vmatpush1.msra.mxu0 0.0
    %1424 = vmatprep.subr.mxu0 0.0
    %1425 = vmatpush1.msra.mxu0 0.0
    %1426 = vmatprep.subr.mxu0 0.0
    %1427 = vmatpush1.msra.mxu0 0.0
    %1428 = vmatprep.subr.mxu0 0.0
    %1429 = vmatpush1.msra.mxu0 0.0
    %1430 = vmatprep.subr.mxu0 0.0
    %1431 = vmatpush1.msra.mxu0 0.0
    %1432 = vmatprep.subr.mxu0 0.0
    %1433 = vmatpush1.msra.mxu0 0.0
    %1434 = vmatprep.subr.mxu0 0.0
    %1435 = vmatpush1.msra.mxu0 0.0
    %1436 = vmatprep.subr.mxu0 0.0
    %1437 = vmatpush1.msra.mxu0 0.0
    %1438 = vmatprep.subr.mxu0 0.0
    %1439 = vmatpush1.msra.mxu0 0.0
    %1440 = vmatprep.mubr.f32.mxu0 0.0
    %1441 = vmatmul.mubr.f32.gmra.mrb[0].mxu0 %v1374
    %v1442 = vpop.f32.mrb[0].mxu0
    %v1443 = vadd.f32 0.0, %v1442
    %v1444 = vpop.f32.mrb[0].mxu0
    %1445 = vdwg.mxu0
    %v1446 = vrcp.pop %v1369
    %v1447 = vmul.f32 %v1443, %v1446
    %v1449 = vsel %vm158, %v1447, 0
    %1451 = vmatprep.subr.mxu0 0.0
    %1452 = vmatpush1.msra.mxu0 %v488
    %1453 = vmatprep.subr.mxu0 0.0
    %1454 = vmatpush1.msra.mxu0 0.0
    %1455 = vmatprep.subr.mxu0 0.0
    %1456 = vmatpush1.msra.mxu0 0.0
    %1457 = vmatprep.subr.mxu0 0.0
    %1458 = vmatpush1.msra.mxu0 0.0
    %1459 = vmatprep.subr.mxu0 0.0
    %1460 = vmatpush1.msra.mxu0 0.0
    %1461 = vmatprep.subr.mxu0 0.0
    %1462 = vmatpush1.msra.mxu0 0.0
    %1463 = vmatprep.subr.mxu0 0.0
    %1464 = vmatpush1.msra.mxu0 0.0
    %1465 = vmatprep.subr.mxu0 0.0
    %1466 = vmatpush1.msra.mxu0 0.0
    %1467 = vmatprep.subr.mxu0 0.0
    %1468 = vmatpush1.msra.mxu0 0.0
    %1469 = vmatprep.subr.mxu0 0.0
    %1470 = vmatpush1.msra.mxu0 0.0
    %1471 = vmatprep.subr.mxu0 0.0
    %1472 = vmatpush1.msra.mxu0 0.0
    %1473 = vmatprep.subr.mxu0 0.0
    %1474 = vmatpush1.msra.mxu0 0.0
    %1475 = vmatprep.subr.mxu0 0.0
    %1476 = vmatpush1.msra.mxu0 0.0
    %1477 = vmatprep.subr.mxu0 0.0
    %1478 = vmatpush1.msra.mxu0 0.0
    %1479 = vmatprep.subr.mxu0 0.0
    %1480 = vmatpush1.msra.mxu0 0.0
    %1481 = vmatprep.subr.mxu0 0.0
    %1482 = vmatpush1.msra.mxu0 0.0
    %1483 = vmatprep.subr.mxu0 0.0
    %1484 = vmatpush1.msra.mxu0 0.0
    %1485 = vmatprep.subr.mxu0 0.0
    %1486 = vmatpush1.msra.mxu0 0.0
    %1487 = vmatprep.subr.mxu0 0.0
    %1488 = vmatpush1.msra.mxu0 0.0
    %1489 = vmatprep.subr.mxu0 0.0
    %1490 = vmatpush1.msra.mxu0 0.0
    %1491 = vmatprep.subr.mxu0 0.0
    %1492 = vmatpush1.msra.mxu0 0.0
    %1493 = vmatprep.subr.mxu0 0.0
    %1494 = vmatpush1.msra.mxu0 0.0
    %1495 = vmatprep.subr.mxu0 0.0
    %1496 = vmatpush1.msra.mxu0 0.0
    %1497 = vmatprep.subr.mxu0 0.0
    %1498 = vmatpush1.msra.mxu0 0.0
    %1499 = vmatprep.subr.mxu0 0.0
    %1500 = vmatpush1.msra.mxu0 0.0
    %1501 = vmatprep.subr.mxu0 0.0
    %1502 = vmatpush1.msra.mxu0 0.0
    %1503 = vmatprep.subr.mxu0 0.0
    %1504 = vmatpush1.msra.mxu0 0.0
    %1505 = vmatprep.subr.mxu0 0.0
    %1506 = vmatpush1.msra.mxu0 0.0
    %1507 = vmatprep.subr.mxu0 0.0
    %1508 = vmatpush1.msra.mxu0 0.0
    %1509 = vmatprep.subr.mxu0 0.0
    %1510 = vmatpush1.msra.mxu0 0.0
    %1511 = vmatprep.subr.mxu0 0.0
    %1512 = vmatpush1.msra.mxu0 0.0
    %1513 = vmatprep.subr.mxu0 0.0
    %1514 = vmatpush1.msra.mxu0 0.0
    %1515 = vmatprep.mubr.f32.mxu0 0.0
    %1516 = vmatmul.mubr.f32.gmra.mrb[0].mxu0 %v1449
    %v1517 = vpop.f32.mrb[0].mxu0
    %v1518 = vadd.f32 0.0, %v1517
    %v1519 = vpop.f32.mrb[0].mxu0
    %1520 = vdwg.mxu0
    %v1522 = vsel %vm158, %v1282, 0
    %1524 = vmatprep.subr.mxu0 0.0
    %1525 = vmatpush1.msra.mxu0 %v321
    %1526 = vmatprep.subr.mxu0 0.0
    %1527 = vmatpush1.msra.mxu0 0.0
    %1528 = vmatprep.subr.mxu0 0.0
    %1529 = vmatpush1.msra.mxu0 0.0
    %1530 = vmatprep.subr.mxu0 0.0
    %1531 = vmatpush1.msra.mxu0 0.0
    %1532 = vmatprep.subr.mxu0 0.0
    %1533 = vmatpush1.msra.mxu0 0.0
    %1534 = vmatprep.subr.mxu0 0.0
    %1535 = vmatpush1.msra.mxu0 0.0
    %1536 = vmatprep.subr.mxu0 0.0
    %1537 = vmatpush1.msra.mxu0 0.0
    %1538 = vmatprep.subr.mxu0 0.0
    %1539 = vmatpush1.msra.mxu0 0.0
    %1540 = vmatprep.subr.mxu0 0.0
    %1541 = vmatpush1.msra.mxu0 0.0
    %1542 = vmatprep.subr.mxu0 0.0
    %1543 = vmatpush1.msra.mxu0 0.0
    %1544 = vmatprep.subr.mxu0 0.0
    %1545 = vmatpush1.msra.mxu0 0.0
    %1546 = vmatprep.subr.mxu0 0.0
    %1547 = vmatpush1.msra.mxu0 0.0
    %1548 = vmatprep.subr.mxu0 0.0
    %1549 = vmatpush1.msra.mxu0 0.0
    %1550 = vmatprep.subr.mxu0 0.0
    %1551 = vmatpush1.msra.mxu0 0.0
    %1552 = vmatprep.subr.mxu0 0.0
    %1553 = vmatpush1.msra.mxu0 0.0
    %1554 = vmatprep.subr.mxu0 0.0
    %1555 = vmatpush1.msra.mxu0 0.0
    %1556 = vmatprep.subr.mxu0 0.0
    %1557 = vmatpush1.msra.mxu0 0.0
    %1558 = vmatprep.subr.mxu0 0.0
    %1559 = vmatpush1.msra.mxu0 0.0
    %1560 = vmatprep.subr.mxu0 0.0
    %1561 = vmatpush1.msra.mxu0 0.0
    %1562 = vmatprep.subr.mxu0 0.0
    %1563 = vmatpush1.msra.mxu0 0.0
    %1564 = vmatprep.subr.mxu0 0.0
    %1565 = vmatpush1.msra.mxu0 0.0
    %1566 = vmatprep.subr.mxu0 0.0
    %1567 = vmatpush1.msra.mxu0 0.0
    %1568 = vmatprep.subr.mxu0 0.0
    %1569 = vmatpush1.msra.mxu0 0.0
    %1570 = vmatprep.subr.mxu0 0.0
    %1571 = vmatpush1.msra.mxu0 0.0
    %1572 = vmatprep.subr.mxu0 0.0
    %1573 = vmatpush1.msra.mxu0 0.0
    %1574 = vmatprep.subr.mxu0 0.0
    %1575 = vmatpush1.msra.mxu0 0.0
    %1576 = vmatprep.subr.mxu0 0.0
    %1577 = vmatpush1.msra.mxu0 0.0
    %1578 = vmatprep.subr.mxu0 0.0
    %1579 = vmatpush1.msra.mxu0 0.0
    %1580 = vmatprep.subr.mxu0 0.0
    %1581 = vmatpush1.msra.mxu0 0.0
    %1582 = vmatprep.subr.mxu0 0.0
    %1583 = vmatpush1.msra.mxu0 0.0
    %1584 = vmatprep.subr.mxu0 0.0
    %1585 = vmatpush1.msra.mxu0 0.0
    %1586 = vmatprep.subr.mxu0 0.0
    %1587 = vmatpush1.msra.mxu0 0.0
    %1588 = vmatprep.mubr.f32.mxu0 0.0
    %1589 = vmatmul.mubr.f32.gmra.mrb[0].mxu0 %v1522
    %v1590 = vpop.f32.mrb[0].mxu0
    %v1591 = vadd.f32 %v1518, %v1590
    %v1592 = vpop.f32.mrb[0].mxu0
    %1593 = vdwg.mxu0
    %1594 = vrot.lane.b32.xlu0 %v1117, 112
    %v1595 = vpop.permute.xlu0 %1594
    %1596 = vrot.lane.b32.xlu0 %v151, 80
    %v1597 = vpop.permute.xlu0 %1596
    %v1598 = vsel %vm158, %v1595, 0
    %v1600 = vsel %vm158, %v1597, 0
    %1602 = vmatprep.subr.mxu0 0.0
    %1603 = vmatpush1.xpose.msra.mxu0 %v1600
    %1604 = vmatprep.subr.mxu0 0.0
    %1605 = vmatpush1.xpose.msra.mxu0 0.0
    %1606 = vmatprep.subr.mxu0 0.0
    %1607 = vmatpush1.xpose.msra.mxu0 0.0
    %1608 = vmatprep.subr.mxu0 0.0
    %1609 = vmatpush1.xpose.msra.mxu0 0.0
    %1610 = vmatprep.subr.mxu0 0.0
    %1611 = vmatpush1.xpose.msra.mxu0 0.0
    %1612 = vmatprep.subr.mxu0 0.0
    %1613 = vmatpush1.xpose.msra.mxu0 0.0
    %1614 = vmatprep.subr.mxu0 0.0
    %1615 = vmatpush1.xpose.msra.mxu0 0.0
    %1616 = vmatprep.subr.mxu0 0.0
    %1617 = vmatpush1.xpose.msra.mxu0 0.0
    %1618 = vmatprep.subr.mxu0 0.0
    %1619 = vmatpush1.xpose.msra.mxu0 0.0
    %1620 = vmatprep.subr.mxu0 0.0
    %1621 = vmatpush1.xpose.msra.mxu0 0.0
    %1622 = vmatprep.subr.mxu0 0.0
    %1623 = vmatpush1.xpose.msra.mxu0 0.0
    %1624 = vmatprep.subr.mxu0 0.0
    %1625 = vmatpush1.xpose.msra.mxu0 0.0
    %1626 = vmatprep.subr.mxu0 0.0
    %1627 = vmatpush1.xpose.msra.mxu0 0.0
    %1628 = vmatprep.subr.mxu0 0.0
    %1629 = vmatpush1.xpose.msra.mxu0 0.0
    %1630 = vmatprep.subr.mxu0 0.0
    %1631 = vmatpush1.xpose.msra.mxu0 0.0
    %1632 = vmatprep.subr.mxu0 0.0
    %1633 = vmatpush1.xpose.msra.mxu0 0.0
    %1634 = vmatprep.subr.mxu0 0.0
    %1635 = vmatpush1.xpose.msra.mxu0 0.0
    %1636 = vmatprep.subr.mxu0 0.0
    %1637 = vmatpush1.xpose.msra.mxu0 0.0
    %1638 = vmatprep.subr.mxu0 0.0
    %1639 = vmatpush1.xpose.msra.mxu0 0.0
    %1640 = vmatprep.subr.mxu0 0.0
    %1641 = vmatpush1.xpose.msra.mxu0 0.0
    %1642 = vmatprep.subr.mxu0 0.0
    %1643 = vmatpush1.xpose.msra.mxu0 0.0
    %1644 = vmatprep.subr.mxu0 0.0
    %1645 = vmatpush1.xpose.msra.mxu0 0.0
    %1646 = vmatprep.subr.mxu0 0.0
    %1647 = vmatpush1.xpose.msra.mxu0 0.0
    %1648 = vmatprep.subr.mxu0 0.0
    %1649 = vmatpush1.xpose.msra.mxu0 0.0
    %1650 = vmatprep.subr.mxu0 0.0
    %1651 = vmatpush1.xpose.msra.mxu0 0.0
    %1652 = vmatprep.subr.mxu0 0.0
    %1653 = vmatpush1.xpose.msra.mxu0 0.0
    %1654 = vmatprep.subr.mxu0 0.0
    %1655 = vmatpush1.xpose.msra.mxu0 0.0
    %1656 = vmatprep.subr.mxu0 0.0
    %1657 = vmatpush1.xpose.msra.mxu0 0.0
    %1658 = vmatprep.subr.mxu0 0.0
    %1659 = vmatpush1.xpose.msra.mxu0 0.0
    %1660 = vmatprep.subr.mxu0 0.0
    %1661 = vmatpush1.xpose.msra.mxu0 0.0
    %1662 = vmatprep.subr.mxu0 0.0
    %1663 = vmatpush1.xpose.msra.mxu0 0.0
    %1664 = vmatprep.subr.mxu0 0.0
    %1665 = vmatpush1.xpose.msra.mxu0 0.0
    %1666 = vmatprep.mubr.f32.mxu0 0.0
    %1667 = vmatmul.mubr.f32.gmra.mrb[0].mxu0 %v1598
    %v1668 = vpop.f32.mrb[0].mxu0
    %v1669 = vadd.f32 0.0, %v1668
    %v1670 = vpop.f32.mrb[0].mxu0
    %1671 = vdwg.mxu0
    %v1672 = vsel %vm158, %v1669, -inf
    %1673 = vmax.xlane.f32.xlu0 %v1672
    %v1674 = vpop.xlane.xlu0 %1673
    %v1675 = vsub.f32 %v1669, %v1674
    %v1676 = vmul.f32 %v1675, 1.442695
    %v1677 = vpow.pop %v1676
    %v1678 = vsel %vm158, %v1677, 0.0
    %1679 = vadd.xlane.f32.xlu0 %v1678
    %v1680 = vpop.xlane.xlu0 %1679
    %1681 = vrot.lane.b32.xlu0 %v151, 48
    %v1682 = vpop.permute.xlu0 %1681
    %v1685 = vsel %vm158, %v1677, 0
    %1687 = vmatprep.subr.mxu0 0.0
    %1688 = vmatpush1.msra.mxu0 %v1682
    %1689 = vmatprep.subr.mxu0 0.0
    %1690 = vmatpush1.msra.mxu0 0.0
    %1691 = vmatprep.subr.mxu0 0.0
    %1692 = vmatpush1.msra.mxu0 0.0
    %1693 = vmatprep.subr.mxu0 0.0
    %1694 = vmatpush1.msra.mxu0 0.0
    %1695 = vmatprep.subr.mxu0 0.0
    %1696 = vmatpush1.msra.mxu0 0.0
    %1697 = vmatprep.subr.mxu0 0.0
    %1698 = vmatpush1.msra.mxu0 0.0
    %1699 = vmatprep.subr.mxu0 0.0
    %1700 = vmatpush1.msra.mxu0 0.0
    %1701 = vmatprep.subr.mxu0 0.0
    %1702 = vmatpush1.msra.mxu0 0.0
    %1703 = vmatprep.subr.mxu0 0.0
    %1704 = vmatpush1.msra.mxu0 0.0
    %1705 = vmatprep.subr.mxu0 0.0
    %1706 = vmatpush1.msra.mxu0 0.0
    %1707 = vmatprep.subr.mxu0 0.0
    %1708 = vmatpush1.msra.mxu0 0.0
    %1709 = vmatprep.subr.mxu0 0.0
    %1710 = vmatpush1.msra.mxu0 0.0
    %1711 = vmatprep.subr.mxu0 0.0
    %1712 = vmatpush1.msra.mxu0 0.0
    %1713 = vmatprep.subr.mxu0 0.0
    %1714 = vmatpush1.msra.mxu0 0.0
    %1715 = vmatprep.subr.mxu0 0.0
    %1716 = vmatpush1.msra.mxu0 0.0
    %1717 = vmatprep.subr.mxu0 0.0
    %1718 = vmatpush1.msra.mxu0 0.0
    %1719 = vmatprep.subr.mxu0 0.0
    %1720 = vmatpush1.msra.mxu0 0.0
    %1721 = vmatprep.subr.mxu0 0.0
    %1722 = vmatpush1.msra.mxu0 0.0
    %1723 = vmatprep.subr.mxu0 0.0
    %1724 = vmatpush1.msra.mxu0 0.0
    %1725 = vmatprep.subr.mxu0 0.0
    %1726 = vmatpush1.msra.mxu0 0.0
    %1727 = vmatprep.subr.mxu0 0.0
    %1728 = vmatpush1.msra.mxu0 0.0
    %1729 = vmatprep.subr.mxu0 0.0
    %1730 = vmatpush1.msra.mxu0 0.0
    %1731 = vmatprep.subr.mxu0 0.0
    %1732 = vmatpush1.msra.mxu0 0.0
    %1733 = vmatprep.subr.mxu0 0.0
    %1734 = vmatpush1.msra.mxu0 0.0
    %1735 = vmatprep.subr.mxu0 0.0
    %1736 = vmatpush1.msra.mxu0 0.0
    %1737 = vmatprep.subr.mxu0 0.0
    %1738 = vmatpush1.msra.mxu0 0.0
    %1739 = vmatprep.subr.mxu0 0.0
    %1740 = vmatpush1.msra.mxu0 0.0
    %1741 = vmatprep.subr.mxu0 0.0
    %1742 = vmatpush1.msra.mxu0 0.0
    %1743 = vmatprep.subr.mxu0 0.0
    %1744 = vmatpush1.msra.mxu0 0.0
    %1745 = vmatprep.subr.mxu0 0.0
    %1746 = vmatpush1.msra.mxu0 0.0
    %1747 = vmatprep.subr.mxu0 0.0
    %1748 = vmatpush1.msra.mxu0 0.0
    %1749 = vmatprep.subr.mxu0 0.0
    %1750 = vmatpush1.msra.mxu0 0.0
    %1751 = vmatprep.mubr.f32.mxu0 0.0
    %1752 = vmatmul.mubr.f32.gmra.mrb[0].mxu0 %v1685
    %v1753 = vpop.f32.mrb[0].mxu0
    %v1754 = vadd.f32 0.0, %v1753
    %v1755 = vpop.f32.mrb[0].mxu0
    %1756 = vdwg.mxu0
    %v1757 = vrcp.pop %v1680
    %v1758 = vmul.f32 %v1754, %v1757
    %v1760 = vsel %vm158, %v1758, 0
    %1762 = vmatprep.subr.mxu0 0.0
    %1763 = vmatpush1.msra.mxu0 %v801
    %1764 = vmatprep.subr.mxu0 0.0
    %1765 = vmatpush1.msra.mxu0 0.0
    %1766 = vmatprep.subr.mxu0 0.0
    %1767 = vmatpush1.msra.mxu0 0.0
    %1768 = vmatprep.subr.mxu0 0.0
    %1769 = vmatpush1.msra.mxu0 0.0
    %1770 = vmatprep.subr.mxu0 0.0
    %1771 = vmatpush1.msra.mxu0 0.0
    %1772 = vmatprep.subr.mxu0 0.0
    %1773 = vmatpush1.msra.mxu0 0.0
    %1774 = vmatprep.subr.mxu0 0.0
    %1775 = vmatpush1.msra.mxu0 0.0
    %1776 = vmatprep.subr.mxu0 0.0
    %1777 = vmatpush1.msra.mxu0 0.0
    %1778 = vmatprep.subr.mxu0 0.0
    %1779 = vmatpush1.msra.mxu0 0.0
    %1780 = vmatprep.subr.mxu0 0.0
    %1781 = vmatpush1.msra.mxu0 0.0
    %1782 = vmatprep.subr.mxu0 0.0
    %1783 = vmatpush1.msra.mxu0 0.0
    %1784 = vmatprep.subr.mxu0 0.0
    %1785 = vmatpush1.msra.mxu0 0.0
    %1786 = vmatprep.subr.mxu0 0.0
    %1787 = vmatpush1.msra.mxu0 0.0
    %1788 = vmatprep.subr.mxu0 0.0
    %1789 = vmatpush1.msra.mxu0 0.0
    %1790 = vmatprep.subr.mxu0 0.0
    %1791 = vmatpush1.msra.mxu0 0.0
    %1792 = vmatprep.subr.mxu0 0.0
    %1793 = vmatpush1.msra.mxu0 0.0
    %1794 = vmatprep.subr.mxu0 0.0
    %1795 = vmatpush1.msra.mxu0 0.0
    %1796 = vmatprep.subr.mxu0 0.0
    %1797 = vmatpush1.msra.mxu0 0.0
    %1798 = vmatprep.subr.mxu0 0.0
    %1799 = vmatpush1.msra.mxu0 0.0
    %1800 = vmatprep.subr.mxu0 0.0
    %1801 = vmatpush1.msra.mxu0 0.0
    %1802 = vmatprep.subr.mxu0 0.0
    %1803 = vmatpush1.msra.mxu0 0.0
    %1804 = vmatprep.subr.mxu0 0.0
    %1805 = vmatpush1.msra.mxu0 0.0
    %1806 = vmatprep.subr.mxu0 0.0
    %1807 = vmatpush1.msra.mxu0 0.0
    %1808 = vmatprep.subr.mxu0 0.0
    %1809 = vmatpush1.msra.mxu0 0.0
    %1810 = vmatprep.subr.mxu0 0.0
    %1811 = vmatpush1.msra.mxu0 0.0
    %1812 = vmatprep.subr.mxu0 0.0
    %1813 = vmatpush1.msra.mxu0 0.0
    %1814 = vmatprep.subr.mxu0 0.0
    %1815 = vmatpush1.msra.mxu0 0.0
    %1816 = vmatprep.subr.mxu0 0.0
    %1817 = vmatpush1.msra.mxu0 0.0
    %1818 = vmatprep.subr.mxu0 0.0
    %1819 = vmatpush1.msra.mxu0 0.0
    %1820 = vmatprep.subr.mxu0 0.0
    %1821 = vmatpush1.msra.mxu0 0.0
    %1822 = vmatprep.subr.mxu0 0.0
    %1823 = vmatpush1.msra.mxu0 0.0
    %1824 = vmatprep.subr.mxu0 0.0
    %1825 = vmatpush1.msra.mxu0 0.0
    %1826 = vmatprep.mubr.f32.mxu0 0.0
    %1827 = vmatmul.mubr.f32.gmra.mrb[0].mxu0 %v1760
    %v1828 = vpop.f32.mrb[0].mxu0
    %v1829 = vadd.f32 0.0, %v1828
    %v1830 = vpop.f32.mrb[0].mxu0
    %1831 = vdwg.mxu0
    %v1832 = vadd.f32 %v1591, %v1829
    %1833 = vrot.lane.b32.xlu0 %v1117, 104
    %v1834 = vpop.permute.xlu0 %1833
    %1835 = vrot.lane.b32.xlu0 %v151, 72
    %v1836 = vpop.permute.xlu0 %1835
    %v1837 = vsel %vm158, %v1834, 0
    %v1839 = vsel %vm158, %v1836, 0
    %1841 = vmatprep.subr.mxu0 0.0
    %1842 = vmatpush1.xpose.msra.mxu0 %v1839
    %1843 = vmatprep.subr.mxu0 0.0
    %1844 = vmatpush1.xpose.msra.mxu0 0.0
    %1845 = vmatprep.subr.mxu0 0.0
    %1846 = vmatpush1.xpose.msra.mxu0 0.0
    %1847 = vmatprep.subr.mxu0 0.0
    %1848 = vmatpush1.xpose.msra.mxu0 0.0
    %1849 = vmatprep.subr.mxu0 0.0
    %1850 = vmatpush1.xpose.msra.mxu0 0.0
    %1851 = vmatprep.subr.mxu0 0.0
    %1852 = vmatpush1.xpose.msra.mxu0 0.0
    %1853 = vmatprep.subr.mxu0 0.0
    %1854 = vmatpush1.xpose.msra.mxu0 0.0
    %1855 = vmatprep.subr.mxu0 0.0
    %1856 = vmatpush1.xpose.msra.mxu0 0.0
    %1857 = vmatprep.subr.mxu0 0.0
    %1858 = vmatpush1.xpose.msra.mxu0 0.0
    %1859 = vmatprep.subr.mxu0 0.0
    %1860 = vmatpush1.xpose.msra.mxu0 0.0
    %1861 = vmatprep.subr.mxu0 0.0
    %1862 = vmatpush1.xpose.msra.mxu0 0.0
    %1863 = vmatprep.subr.mxu0 0.0
    %1864 = vmatpush1.xpose.msra.mxu0 0.0
    %1865 = vmatprep.subr.mxu0 0.0
    %1866 = vmatpush1.xpose.msra.mxu0 0.0
    %1867 = vmatprep.subr.mxu0 0.0
    %1868 = vmatpush1.xpose.msra.mxu0 0.0
    %1869 = vmatprep.subr.mxu0 0.0
    %1870 = vmatpush1.xpose.msra.mxu0 0.0
    %1871 = vmatprep.subr.mxu0 0.0
    %1872 = vmatpush1.xpose.msra.mxu0 0.0
    %1873 = vmatprep.subr.mxu0 0.0
    %1874 = vmatpush1.xpose.msra.mxu0 0.0
    %1875 = vmatprep.subr.mxu0 0.0
    %1876 = vmatpush1.xpose.msra.mxu0 0.0
    %1877 = vmatprep.subr.mxu0 0.0
    %1878 = vmatpush1.xpose.msra.mxu0 0.0
    %1879 = vmatprep.subr.mxu0 0.0
    %1880 = vmatpush1.xpose.msra.mxu0 0.0
    %1881 = vmatprep.subr.mxu0 0.0
    %1882 = vmatpush1.xpose.msra.mxu0 0.0
    %1883 = vmatprep.subr.mxu0 0.0
    %1884 = vmatpush1.xpose.msra.mxu0 0.0
    %1885 = vmatprep.subr.mxu0 0.0
    %1886 = vmatpush1.xpose.msra.mxu0 0.0
    %1887 = vmatprep.subr.mxu0 0.0
    %1888 = vmatpush1.xpose.msra.mxu0 0.0
    %1889 = vmatprep.subr.mxu0 0.0
    %1890 = vmatpush1.xpose.msra.mxu0 0.0
    %1891 = vmatprep.subr.mxu0 0.0
    %1892 = vmatpush1.xpose.msra.mxu0 0.0
    %1893 = vmatprep.subr.mxu0 0.0
    %1894 = vmatpush1.xpose.msra.mxu0 0.0
    %1895 = vmatprep.subr.mxu0 0.0
    %1896 = vmatpush1.xpose.msra.mxu0 0.0
    %1897 = vmatprep.subr.mxu0 0.0
    %1898 = vmatpush1.xpose.msra.mxu0 0.0
    %1899 = vmatprep.subr.mxu0 0.0
    %1900 = vmatpush1.xpose.msra.mxu0 0.0
    %1901 = vmatprep.subr.mxu0 0.0
    %1902 = vmatpush1.xpose.msra.mxu0 0.0
    %1903 = vmatprep.subr.mxu0 0.0
    %1904 = vmatpush1.xpose.msra.mxu0 0.0
    %1905 = vmatprep.mubr.f32.mxu0 0.0
    %1906 = vmatmul.mubr.f32.gmra.mrb[0].mxu0 %v1837
    %v1907 = vpop.f32.mrb[0].mxu0
    %v1908 = vadd.f32 0.0, %v1907
    %v1909 = vpop.f32.mrb[0].mxu0
    %1910 = vdwg.mxu0
    %v1911 = vsel %vm158, %v1908, -inf
    %1912 = vmax.xlane.f32.xlu0 %v1911
    %v1913 = vpop.xlane.xlu0 %1912
    %v1914 = vsub.f32 %v1908, %v1913
    %v1915 = vmul.f32 %v1914, 1.442695
    %v1916 = vpow.pop %v1915
    %v1917 = vsel %vm158, %v1916, 0.0
    %1918 = vadd.xlane.f32.xlu0 %v1917
    %v1919 = vpop.xlane.xlu0 %1918
    %1920 = vrot.lane.b32.xlu0 %v151, 40
    %v1921 = vpop.permute.xlu0 %1920
    %v1924 = vsel %vm158, %v1916, 0
    %1926 = vmatprep.subr.mxu0 0.0
    %1927 = vmatpush1.msra.mxu0 %v1921
    %1928 = vmatprep.subr.mxu0 0.0
    %1929 = vmatpush1.msra.mxu0 0.0
    %1930 = vmatprep.subr.mxu0 0.0
    %1931 = vmatpush1.msra.mxu0 0.0
    %1932 = vmatprep.subr.mxu0 0.0
    %1933 = vmatpush1.msra.mxu0 0.0
    %1934 = vmatprep.subr.mxu0 0.0
    %1935 = vmatpush1.msra.mxu0 0.0
    %1936 = vmatprep.subr.mxu0 0.0
    %1937 = vmatpush1.msra.mxu0 0.0
    %1938 = vmatprep.subr.mxu0 0.0
    %1939 = vmatpush1.msra.mxu0 0.0
    %1940 = vmatprep.subr.mxu0 0.0
    %1941 = vmatpush1.msra.mxu0 0.0
    %1942 = vmatprep.subr.mxu0 0.0
    %1943 = vmatpush1.msra.mxu0 0.0
    %1944 = vmatprep.subr.mxu0 0.0
    %1945 = vmatpush1.msra.mxu0 0.0
    %1946 = vmatprep.subr.mxu0 0.0
    %1947 = vmatpush1.msra.mxu0 0.0
    %1948 = vmatprep.subr.mxu0 0.0
    %1949 = vmatpush1.msra.mxu0 0.0
    %1950 = vmatprep.subr.mxu0 0.0
    %1951 = vmatpush1.msra.mxu0 0.0
    %1952 = vmatprep.subr.mxu0 0.0
    %1953 = vmatpush1.msra.mxu0 0.0
    %1954 = vmatprep.subr.mxu0 0.0
    %1955 = vmatpush1.msra.mxu0 0.0
    %1956 = vmatprep.subr.mxu0 0.0
    %1957 = vmatpush1.msra.mxu0 0.0
    %1958 = vmatprep.subr.mxu0 0.0
    %1959 = vmatpush1.msra.mxu0 0.0
    %1960 = vmatprep.subr.mxu0 0.0
    %1961 = vmatpush1.msra.mxu0 0.0
    %1962 = vmatprep.subr.mxu0 0.0
    %1963 = vmatpush1.msra.mxu0 0.0
    %1964 = vmatprep.subr.mxu0 0.0
    %1965 = vmatpush1.msra.mxu0 0.0
    %1966 = vmatprep.subr.mxu0 0.0
    %1967 = vmatpush1.msra.mxu0 0.0
    %1968 = vmatprep.subr.mxu0 0.0
    %1969 = vmatpush1.msra.mxu0 0.0
    %1970 = vmatprep.subr.mxu0 0.0
    %1971 = vmatpush1.msra.mxu0 0.0
    %1972 = vmatprep.subr.mxu0 0.0
    %1973 = vmatpush1.msra.mxu0 0.0
    %1974 = vmatprep.subr.mxu0 0.0
    %1975 = vmatpush1.msra.mxu0 0.0
    %1976 = vmatprep.subr.mxu0 0.0
    %1977 = vmatpush1.msra.mxu0 0.0
    %1978 = vmatprep.subr.mxu0 0.0
    %1979 = vmatpush1.msra.mxu0 0.0
    %1980 = vmatprep.subr.mxu0 0.0
    %1981 = vmatpush1.msra.mxu0 0.0
    %1982 = vmatprep.subr.mxu0 0.0
    %1983 = vmatpush1.msra.mxu0 0.0
    %1984 = vmatprep.subr.mxu0 0.0
    %1985 = vmatpush1.msra.mxu0 0.0
    %1986 = vmatprep.subr.mxu0 0.0
    %1987 = vmatpush1.msra.mxu0 0.0
    %1988 = vmatprep.subr.mxu0 0.0
    %1989 = vmatpush1.msra.mxu0 0.0
    %1990 = vmatprep.mubr.f32.mxu0 0.0
    %1991 = vmatmul.mubr.f32.gmra.mrb[0].mxu0 %v1924
    %v1992 = vpop.f32.mrb[0].mxu0
    %v1993 = vadd.f32 0.0, %v1992
    %v1994 = vpop.f32.mrb[0].mxu0
    %1995 = vdwg.mxu0
    %v1996 = vrcp.pop %v1919
    %v1997 = vmul.f32 %v1993, %v1996
    %v1999 = vsel %vm158, %v1997, 0
    %2001 = vmatprep.subr.mxu0 0.0
    %2002 = vmatpush1.msra.mxu0 %v1042
    %2003 = vmatprep.subr.mxu0 0.0
    %2004 = vmatpush1.msra.mxu0 0.0
    %2005 = vmatprep.subr.mxu0 0.0
    %2006 = vmatpush1.msra.mxu0 0.0
    %2007 = vmatprep.subr.mxu0 0.0
    %2008 = vmatpush1.msra.mxu0 0.0
    %2009 = vmatprep.subr.mxu0 0.0
    %2010 = vmatpush1.msra.mxu0 0.0
    %2011 = vmatprep.subr.mxu0 0.0
    %2012 = vmatpush1.msra.mxu0 0.0
    %2013 = vmatprep.subr.mxu0 0.0
    %2014 = vmatpush1.msra.mxu0 0.0
    %2015 = vmatprep.subr.mxu0 0.0
    %2016 = vmatpush1.msra.mxu0 0.0
    %2017 = vmatprep.subr.mxu0 0.0
    %2018 = vmatpush1.msra.mxu0 0.0
    %2019 = vmatprep.subr.mxu0 0.0
    %2020 = vmatpush1.msra.mxu0 0.0
    %2021 = vmatprep.subr.mxu0 0.0
    %2022 = vmatpush1.msra.mxu0 0.0
    %2023 = vmatprep.subr.mxu0 0.0
    %2024 = vmatpush1.msra.mxu0 0.0
    %2025 = vmatprep.subr.mxu0 0.0
    %2026 = vmatpush1.msra.mxu0 0.0
    %2027 = vmatprep.subr.mxu0 0.0
    %2028 = vmatpush1.msra.mxu0 0.0
    %2029 = vmatprep.subr.mxu0 0.0
    %2030 = vmatpush1.msra.mxu0 0.0
    %2031 = vmatprep.subr.mxu0 0.0
    %2032 = vmatpush1.msra.mxu0 0.0
    %2033 = vmatprep.subr.mxu0 0.0
    %2034 = vmatpush1.msra.mxu0 0.0
    %2035 = vmatprep.subr.mxu0 0.0
    %2036 = vmatpush1.msra.mxu0 0.0
    %2037 = vmatprep.subr.mxu0 0.0
    %2038 = vmatpush1.msra.mxu0 0.0
    %2039 = vmatprep.subr.mxu0 0.0
    %2040 = vmatpush1.msra.mxu0 0.0
    %2041 = vmatprep.subr.mxu0 0.0
    %2042 = vmatpush1.msra.mxu0 0.0
    %2043 = vmatprep.subr.mxu0 0.0
    %2044 = vmatpush1.msra.mxu0 0.0
    %2045 = vmatprep.subr.mxu0 0.0
    %2046 = vmatpush1.msra.mxu0 0.0
    %2047 = vmatprep.subr.mxu0 0.0
    %2048 = vmatpush1.msra.mxu0 0.0
    %2049 = vmatprep.subr.mxu0 0.0
    %2050 = vmatpush1.msra.mxu0 0.0
    %2051 = vmatprep.subr.mxu0 0.0
    %2052 = vmatpush1.msra.mxu0 0.0
    %2053 = vmatprep.subr.mxu0 0.0
    %2054 = vmatpush1.msra.mxu0 0.0
    %2055 = vmatprep.subr.mxu0 0.0
    %2056 = vmatpush1.msra.mxu0 0.0
    %2057 = vmatprep.subr.mxu0 0.0
    %2058 = vmatpush1.msra.mxu0 0.0
    %2059 = vmatprep.subr.mxu0 0.0
    %2060 = vmatpush1.msra.mxu0 0.0
    %2061 = vmatprep.subr.mxu0 0.0
    %2062 = vmatpush1.msra.mxu0 0.0
    %2063 = vmatprep.subr.mxu0 0.0
    %2064 = vmatpush1.msra.mxu0 0.0
    %2065 = vmatprep.mubr.f32.mxu0 0.0
    %2066 = vmatmul.mubr.f32.gmra.mrb[0].mxu0 %v1999
    %v2067 = vpop.f32.mrb[0].mxu0
    %v2068 = vadd.f32 0.0, %v2067
    %v2069 = vpop.f32.mrb[0].mxu0
    %2070 = vdwg.mxu0
    %v2071 = vadd.f32 %v1832, %v2068
    %v2072 = vld [vmem:[%s6] sm:$0x1]
    %v2074 = vlaneseq
    %v2075 = vshrl.u32 %v2074, 7
    %v2076 = vsub.s32 0, %v2075
    %v2077 = vrot.slane %v2072, %v2076
    %v2079 = vadd.f32 %v1116, %v2077
    %v2080 = vadd.f32 %v2071, %v2077
    %v2081 = vadd.f32 %v59, %v2079
    %v2082 = vadd.f32 %v60, %v2080
    %v2083 = vld [vmem:[%s9] sm:$0x1]
    %v2084 = vld [vmem:[%s10] sm:$0x1]
    %v2085 = vsel %vm72, %v2081, 0.0
    %2086 = vadd.xlane.f32.xlu0 %v2085
    %v2087 = vpop.xlane.xlu0 %2086
    %v2088 = vsel %vm72, %v2082, 0.0
    %2089 = vadd.xlane.f32.xlu0 %v2088
    %v2090 = vpop.xlane.xlu0 %2089
    %v2091 = vrcp.pop 32.0
    %v2092 = vmul.f32 %v2087, %v2091
    %v2093 = vmul.f32 %v2090, %v2091
    %v2094 = vsub.f32 %v2081, %v2092
    %v2095 = vsub.f32 %v2082, %v2093
    %v2096 = vmul.f32 %v2094, %v2094
    %v2097 = vmul.f32 %v2095, %v2095
    %v2098 = vsel %vm72, %v2096, 0.0
    %2099 = vadd.xlane.f32.xlu0 %v2098
    %v2100 = vpop.xlane.xlu0 %2099
    %v2101 = vsel %vm72, %v2097, 0.0
    %2102 = vadd.xlane.f32.xlu0 %v2101
    %v2103 = vpop.xlane.xlu0 %2102
    %v2104 = vmul.f32 %v2100, %v2091
    %v2105 = vmul.f32 %v2103, %v2091
    %v2106 = vadd.f32 %v2104, 1e-05
    %v2107 = vadd.f32 %v2105, 1e-05
    %v2108 = vrsqrt.pop %v2106
    %v2109 = vrsqrt.pop %v2107
    %v2110 = vmul.f32 %v2094, %v2108
    %v2111 = vmul.f32 %v2095, %v2109
    %v2113 = vlaneseq
    %v2114 = vshrl.u32 %v2113, 7
    %v2115 = vsub.s32 0, %v2114
    %v2116 = vrot.slane %v2083, %v2115
    %v2118 = vmul.f32 %v2110, %v2116
    %v2119 = vmul.f32 %v2111, %v2116
    %v2121 = vlaneseq
    %v2122 = vshrl.u32 %v2121, 7
    %v2123 = vsub.s32 0, %v2122
    %v2124 = vrot.slane %v2084, %v2123
    %v2126 = vadd.f32 %v2118, %v2124
    %v2127 = vadd.f32 %v2119, %v2124
    %v2128 = vld [vmem:[%s3] sm:$0xff]
    %v2129 = vld [vmem:[%s3 + $0x8] sm:$0xff]
    %v2130 = vld [vmem:[%s3 + $0x10] sm:$0xff]
    %v2131 = vld [vmem:[%s3 + $0x18] sm:$0xff]
    %v2132 = vld [vmem:[%s7] sm:$0x1]
    %v2134 = vlaneseq
    %v2135 = vshrl.u32 %v2134, 7
    %v2136 = vsub.s32 0, %v2135
    %v2137 = vrot.slane %v2132, %v2136
    %v2140 = vsel %vm72, %v2126, 0
    %v2143 = vsel %vm72, %v2127, 0
    %2145 = vmatprep.subr.mxu0 0.0
    %2146 = vmatpush1.msra.mxu0 %v2128
    %2147 = vmatprep.subr.mxu0 0.0
    %2148 = vmatpush1.msra.mxu0 %v2129
    %2149 = vmatprep.subr.mxu0 0.0
    %2150 = vmatpush1.msra.mxu0 %v2130
    %2151 = vmatprep.subr.mxu0 0.0
    %2152 = vmatpush1.msra.mxu0 %v2131
    %2153 = vmatprep.subr.mxu0 0.0
    %2154 = vmatpush1.msra.mxu0 0.0
    %2155 = vmatprep.subr.mxu0 0.0
    %2156 = vmatpush1.msra.mxu0 0.0
    %2157 = vmatprep.subr.mxu0 0.0
    %2158 = vmatpush1.msra.mxu0 0.0
    %2159 = vmatprep.subr.mxu0 0.0
    %2160 = vmatpush1.msra.mxu0 0.0
    %2161 = vmatprep.subr.mxu0 0.0
    %2162 = vmatpush1.msra.mxu0 0.0
    %2163 = vmatprep.subr.mxu0 0.0
    %2164 = vmatpush1.msra.mxu0 0.0
    %2165 = vmatprep.subr.mxu0 0.0
    %2166 = vmatpush1.msra.mxu0 0.0
    %2167 = vmatprep.subr.mxu0 0.0
    %2168 = vmatpush1.msra.mxu0 0.0
    %2169 = vmatprep.subr.mxu0 0.0
    %2170 = vmatpush1.msra.mxu0 0.0
    %2171 = vmatprep.subr.mxu0 0.0
    %2172 = vmatpush1.msra.mxu0 0.0
    %2173 = vmatprep.subr.mxu0 0.0
    %2174 = vmatpush1.msra.mxu0 0.0
    %2175 = vmatprep.subr.mxu0 0.0
    %2176 = vmatpush1.msra.mxu0 0.0
    %2177 = vmatprep.subr.mxu0 0.0
    %2178 = vmatpush1.msra.mxu0 0.0
    %2179 = vmatprep.subr.mxu0 0.0
    %2180 = vmatpush1.msra.mxu0 0.0
    %2181 = vmatprep.subr.mxu0 0.0
    %2182 = vmatpush1.msra.mxu0 0.0
    %2183 = vmatprep.subr.mxu0 0.0
    %2184 = vmatpush1.msra.mxu0 0.0
    %2185 = vmatprep.subr.mxu0 0.0
    %2186 = vmatpush1.msra.mxu0 0.0
    %2187 = vmatprep.subr.mxu0 0.0
    %2188 = vmatpush1.msra.mxu0 0.0
    %2189 = vmatprep.subr.mxu0 0.0
    %2190 = vmatpush1.msra.mxu0 0.0
    %2191 = vmatprep.subr.mxu0 0.0
    %2192 = vmatpush1.msra.mxu0 0.0
    %2193 = vmatprep.subr.mxu0 0.0
    %2194 = vmatpush1.msra.mxu0 0.0
    %2195 = vmatprep.subr.mxu0 0.0
    %2196 = vmatpush1.msra.mxu0 0.0
    %2197 = vmatprep.subr.mxu0 0.0
    %2198 = vmatpush1.msra.mxu0 0.0
    %2199 = vmatprep.subr.mxu0 0.0
    %2200 = vmatpush1.msra.mxu0 0.0
    %2201 = vmatprep.subr.mxu0 0.0
    %2202 = vmatpush1.msra.mxu0 0.0
    %2203 = vmatprep.subr.mxu0 0.0
    %2204 = vmatpush1.msra.mxu0 0.0
    %2205 = vmatprep.subr.mxu0 0.0
    %2206 = vmatpush1.msra.mxu0 0.0
    %2207 = vmatprep.subr.mxu0 0.0
    %2208 = vmatpush1.msra.mxu0 0.0
    %2209 = vmatprep.mubr.f32.mxu0 0.0
    %2210 = vmatmul.mubr.f32.gmra.mrb[0].mxu0 %v2140
    %v2211 = vpop.f32.mrb[0].mxu0
    %v2212 = vadd.f32 %v2137, %v2211
    %v2213 = vpop.f32.mrb[0].mxu0
    %2214 = vmatprep.mubr.f32.mxu0 0.0
    %2215 = vmatmul.mubr.f32.gmra.mrb[0].mxu0 %v2143
    %v2216 = vpop.f32.mrb[0].mxu0
    %v2217 = vadd.f32 %v2137, %v2216
    %v2218 = vpop.f32.mrb[0].mxu0
    %2219 = vdwg.mxu0
    %v2220 = vmax.f32 %v2212, 0.0
    %v2221 = vmax.f32 %v2217, 0.0
    %v2222 = vld [vmem:[%s4] sm:$0xff]
    %v2223 = vld [vmem:[%s4 + $0x8] sm:$0xff]
    %v2224 = vld [vmem:[%s4 + $0x10] sm:$0xff]
    %v2225 = vld [vmem:[%s4 + $0x18] sm:$0xff]
    %v2226 = vld [vmem:[%s4 + $0x20] sm:$0xff]
    %v2227 = vld [vmem:[%s4 + $0x28] sm:$0xff]
    %v2228 = vld [vmem:[%s4 + $0x30] sm:$0xff]
    %v2229 = vld [vmem:[%s4 + $0x38] sm:$0xff]
    %v2230 = vld [vmem:[%s8] sm:$0x1]
    %v2232 = vlaneseq
    %v2233 = vshrl.u32 %v2232, 7
    %v2234 = vsub.s32 0, %v2233
    %v2235 = vrot.slane %v2230, %v2234
    %vm2237 = vcmask 523264
    %v2239 = vsel %vm2237, %v2220, 0
    %v2242 = vsel %vm2237, %v2221, 0
    %2244 = vmatprep.subr.mxu0 0.0
    %2245 = vmatpush1.msra.mxu0 %v2222
    %2246 = vmatprep.subr.mxu0 0.0
    %2247 = vmatpush1.msra.mxu0 %v2223
    %2248 = vmatprep.subr.mxu0 0.0
    %2249 = vmatpush1.msra.mxu0 %v2224
    %2250 = vmatprep.subr.mxu0 0.0
    %2251 = vmatpush1.msra.mxu0 %v2225
    %2252 = vmatprep.subr.mxu0 0.0
    %2253 = vmatpush1.msra.mxu0 %v2226
    %2254 = vmatprep.subr.mxu0 0.0
    %2255 = vmatpush1.msra.mxu0 %v2227
    %2256 = vmatprep.subr.mxu0 0.0
    %2257 = vmatpush1.msra.mxu0 %v2228
    %2258 = vmatprep.subr.mxu0 0.0
    %2259 = vmatpush1.msra.mxu0 %v2229
    %2260 = vmatprep.subr.mxu0 0.0
    %2261 = vmatpush1.msra.mxu0 0.0
    %2262 = vmatprep.subr.mxu0 0.0
    %2263 = vmatpush1.msra.mxu0 0.0
    %2264 = vmatprep.subr.mxu0 0.0
    %2265 = vmatpush1.msra.mxu0 0.0
    %2266 = vmatprep.subr.mxu0 0.0
    %2267 = vmatpush1.msra.mxu0 0.0
    %2268 = vmatprep.subr.mxu0 0.0
    %2269 = vmatpush1.msra.mxu0 0.0
    %2270 = vmatprep.subr.mxu0 0.0
    %2271 = vmatpush1.msra.mxu0 0.0
    %2272 = vmatprep.subr.mxu0 0.0
    %2273 = vmatpush1.msra.mxu0 0.0
    %2274 = vmatprep.subr.mxu0 0.0
    %2275 = vmatpush1.msra.mxu0 0.0
    %2276 = vmatprep.subr.mxu0 0.0
    %2277 = vmatpush1.msra.mxu0 0.0
    %2278 = vmatprep.subr.mxu0 0.0
    %2279 = vmatpush1.msra.mxu0 0.0
    %2280 = vmatprep.subr.mxu0 0.0
    %2281 = vmatpush1.msra.mxu0 0.0
    %2282 = vmatprep.subr.mxu0 0.0
    %2283 = vmatpush1.msra.mxu0 0.0
    %2284 = vmatprep.subr.mxu0 0.0
    %2285 = vmatpush1.msra.mxu0 0.0
    %2286 = vmatprep.subr.mxu0 0.0
    %2287 = vmatpush1.msra.mxu0 0.0
    %2288 = vmatprep.subr.mxu0 0.0
    %2289 = vmatpush1.msra.mxu0 0.0
    %2290 = vmatprep.subr.mxu0 0.0
    %2291 = vmatpush1.msra.mxu0 0.0
    %2292 = vmatprep.subr.mxu0 0.0
    %2293 = vmatpush1.msra.mxu0 0.0
    %2294 = vmatprep.subr.mxu0 0.0
    %2295 = vmatpush1.msra.mxu0 0.0
    %2296 = vmatprep.subr.mxu0 0.0
    %2297 = vmatpush1.msra.mxu0 0.0
    %2298 = vmatprep.subr.mxu0 0.0
    %2299 = vmatpush1.msra.mxu0 0.0
    %2300 = vmatprep.subr.mxu0 0.0
    %2301 = vmatpush1.msra.mxu0 0.0
    %2302 = vmatprep.subr.mxu0 0.0
    %2303 = vmatpush1.msra.mxu0 0.0
    %2304 = vmatprep.subr.mxu0 0.0
    %2305 = vmatpush1.msra.mxu0 0.0
    %2306 = vmatprep.subr.mxu0 0.0
    %2307 = vmatpush1.msra.mxu0 0.0
    %2308 = vmatprep.mubr.f32.mxu0 0.0
    %2309 = vmatmul.mubr.f32.gmra.mrb[0].mxu0 %v2239
    %v2310 = vpop.f32.mrb[0].mxu0
    %v2311 = vadd.f32 %v2235, %v2310
    %v2312 = vpop.f32.mrb[0].mxu0
    %2313 = vmatprep.mubr.f32.mxu0 0.0
    %2314 = vmatmul.mubr.f32.gmra.mrb[0].mxu0 %v2242
    %v2315 = vpop.f32.mrb[0].mxu0
    %v2316 = vadd.f32 %v2235, %v2315
    %v2317 = vpop.f32.mrb[0].mxu0
    %2318 = vdwg.mxu0
    %v2319 = vadd.f32 %v2126, %v2311
    %v2320 = vadd.f32 %v2127, %v2316
    %v2321 = vld [vmem:[%s11] sm:$0x1]
    %v2322 = vld [vmem:[%s12] sm:$0x1]
    %v2323 = vsel %vm72, %v2319, 0.0
    %2324 = vadd.xlane.f32.xlu0 %v2323
    %v2325 = vpop.xlane.xlu0 %2324
    %v2326 = vsel %vm72, %v2320, 0.0
    %2327 = vadd.xlane.f32.xlu0 %v2326
    %v2328 = vpop.xlane.xlu0 %2327
    %v2329 = vmul.f32 %v2325, %v2091
    %v2330 = vmul.f32 %v2328, %v2091
    %v2331 = vsub.f32 %v2319, %v2329
    %v2332 = vsub.f32 %v2320, %v2330
    %v2333 = vmul.f32 %v2331, %v2331
    %v2334 = vmul.f32 %v2332, %v2332
    %v2335 = vsel %vm72, %v2333, 0.0
    %2336 = vadd.xlane.f32.xlu0 %v2335
    %v2337 = vpop.xlane.xlu0 %2336
    %v2338 = vsel %vm72, %v2334, 0.0
    %2339 = vadd.xlane.f32.xlu0 %v2338
    %v2340 = vpop.xlane.xlu0 %2339
    %v2341 = vmul.f32 %v2337, %v2091
    %v2342 = vmul.f32 %v2340, %v2091
    %v2343 = vadd.f32 %v2341, 1e-05
    %v2344 = vadd.f32 %v2342, 1e-05
    %v2345 = vrsqrt.pop %v2343
    %v2346 = vrsqrt.pop %v2344
    %v2347 = vmul.f32 %v2331, %v2345
    %v2348 = vmul.f32 %v2332, %v2346
    %v2350 = vlaneseq
    %v2351 = vshrl.u32 %v2350, 7
    %v2352 = vsub.s32 0, %v2351
    %v2353 = vrot.slane %v2321, %v2352
    %v2355 = vmul.f32 %v2347, %v2353
    %v2356 = vmul.f32 %v2348, %v2353
    %v2358 = vlaneseq
    %v2359 = vshrl.u32 %v2358, 7
    %v2360 = vsub.s32 0, %v2359
    %v2361 = vrot.slane %v2322, %v2360
    %v2363 = vadd.f32 %v2355, %v2361
    %v2364 = vadd.f32 %v2356, %v2361
    %2365 = vst.msk [vmem:[#allocation5] sm:$0xff] %vm72, %v2363
    %2366 = vst.msk [vmem:[#allocation5 + $0x8] sm:$0xff] %vm72, %v2364
    // Predicated region
    $region58: #{tpu_custom_call.1} parent=1 // pred_check
      _
    $region59: #{tpu_custom_call.1} parent=1 // pred_check_branch
      %2368 = sbr.rel (0) target = $region61
    $region60: #{tpu_custom_call.1} parent=1 // pred_region
      %s2370 = ssub.s32 256, 256
      %2371 = vsyncadd [#allocation4], %s2370
      %s2372 = sshll.u32 [#allocation5], 4
      %s2373 = int_to_ptr.vmem [resolvable:$true] %s2372
      %2378 = dma.vmem_to_hbm [thread:$0]  %s2373, 256, %s13, [#allocation4], 128, 128, 8
    $region61: #{tpu_custom_call.1} parent=1 // pred_fallthru
      _
    // Predicated region
    $region62: #{tpu_custom_call.1} parent=1 // pred_check
      _
    $region63: #{tpu_custom_call.1} parent=1 // pred_check_branch
      %2380 = sbr.rel (0) target = $region65
    $region64: #{tpu_custom_call.1} parent=1 // pred_region
      %2381 = dma.done [#allocation4], 256
    $region65: #{tpu_custom_call.1} parent=1 // pred_fallthru
      _
    %2382 = vsyncpa [#allocation3], 1
    %2383 = vsyncpa [#allocation4], 1

</llo_original>
